<compile_context>
chip_gen: v7x
topology: tpu7x:2x2x1
jax: 0.10.0
libtpu: 0.0.40
codegen_flags: <defaults>
</compile_context>

<pallas_src>
import math

import jax
import jax.numpy as jnp
from jax.experimental import pallas as pl
from jax.experimental.pallas import tpu as pltpu

BN_EPS = 1e-5
POOL_K, POOL_S = 5, 3


def auxiliary_head_forward(x, params):
    """x: (N, C, H, W) float32 (NCHW, same as PyTorch)."""
    N, C, H, W = x.shape
    num_classes = params["w_fc"].shape[1]
    H1 = (H - POOL_K) // POOL_S + 1
    W1 = (W - POOL_K) // POOL_S + 1
    if H1 < 2 or W1 < 2:
        raise ValueError(
            f"AuxiliaryHead needs a pooled map >= 2x2, got {H1}x{W1} "
            f"(input spatial {H}x{W} too small).")
    M1 = H1 * W1                      # pooled positions per sample
    H2, W2 = H1 - 1, W1 - 1           # 2x2-conv output size
    K1 = C * POOL_K * POOL_K
    K1p = ((K1 + 127) // 128) * 128   # lane-dense K for the 1x1-conv matmul
    cls_pad = max(128, ((num_classes + 127) // 128) * 128)

    # ---------------- batch-block sizing (generation aware / conservative) --
    # Target ~512 matmul rows per step; keep the double-buffered patch block
    # under ~8 MiB so everything fits v7x's 64 MiB VMEM (and v5e's raised
    # scoped limit); keep >= 2 grid steps for v7x's 2 TensorCores.
    rows_target = 512
    per_sample = M1 * K1p * 2                                   # bf16 bytes
    b = max(1, rows_target // M1)
    b = min(b, max(1, (8 * 1024 * 1024) // (2 * per_sample)))
    if N >= 2:
        b = min(b, (N + 1) // 2)
    else:
        b = 1
    align = 8 // math.gcd(M1, 8)      # make B*M1 a multiple of 8 sublanes
    B = ((b + align - 1) // align) * align
    N_pad = ((N + B - 1) // B) * B
    n_steps = N_pad // B
    R = B * M1                        # rows per grid step

    # ---------------- host-side folding / layout (single HLOs, no loops) ----
    # BN1 + 1/25 avg-pool folded into the 1x1 conv.
    s1 = params["bn1_gamma"] * jax.lax.rsqrt(params["bn1_var"] + BN_EPS)      # (1,128)
    w1f = (jnp.repeat(params["w_conv1"], POOL_K * POOL_K, axis=0)
           * (1.0 / (POOL_K * POOL_K)) * s1)                                  # (25C,128)
    w1f = jnp.pad(w1f, ((0, K1p - K1), (0, 0))).astype(jnp.bfloat16)          # (K1p,128)
    b1f = params["bn1_beta"] - params["bn1_mean"] * s1                        # (1,128)

    # BN2 folded into the 2x2 conv; taps stacked along K for ONE K=512 matmul:
    # row index = (kh*2 + kw)*128 + cin.
    s2 = params["bn2_gamma"] * jax.lax.rsqrt(params["bn2_var"] + BN_EPS)      # (1,768)
    w2f = (params["w_conv2"] * s2).reshape(128, 2, 2, 768)                    # (cin,kh,kw,o)
    w2f = w2f.transpose(1, 2, 0, 3).reshape(4 * 128, 768).astype(jnp.bfloat16)
    b2f = params["bn2_beta"] - params["bn2_mean"] * s2                        # (1,768)

    # Classifier kept in f32 (logit precision), padded to a 128-lane store.
    wfc = jnp.pad(params["w_fc"], ((0, 0), (0, cls_pad - num_classes)))       # (768,cls_pad)
    bfc = jnp.pad(params["b_fc"], ((0, 0), (0, cls_pad - num_classes)))       # (1,cls_pad)

    # ReLU host-side (fuses into the patch HLO; commutes with patch extraction),
    # then 5x5/stride-3 im2col, channel-major taps: idx = c*25 + (kh*5+kw).
    patches = jax.lax.conv_general_dilated_patches(
        jnp.maximum(x, 0.0), (POOL_K, POOL_K), (POOL_S, POOL_S), "VALID")     # (N,25C,H1,W1)
    patches = patches.transpose(0, 2, 3, 1).reshape(N, M1, K1)
    patches = jnp.pad(patches, ((0, N_pad - N), (0, 0), (0, K1p - K1)))
    patches = patches.astype(jnp.bfloat16)                                    # (N_pad,M1,K1p)

    inv_pool = 1.0 / (H2 * W2)

    # ---------------- fused kernel: B samples per grid step -----------------
    def kernel(p_ref, w1_ref, b1_ref, w2_ref, b2_ref, wfc_ref, bfc_ref, out_ref):
        # (AvgPool folded into) 1x1 conv + BN1 + ReLU over all B*M1 positions.
        p = p_ref[...].reshape(R, K1p)                                    # bf16
        f1 = jnp.dot(p, w1_ref[...], preferred_element_type=jnp.float32)
        f1 = jnp.maximum(f1 + b1_ref[...], 0.0)                           # (R,128) f32

        # 2x2 conv (128->768) as ONE K=512 matmul: lane-concat four tap-shifted
        # copies of f1 (XLU rolls; wrapped rows are masked out of the pooling).
        taps = [f1]
        for s in (1, W1, W1 + 1):
            taps.append(pltpu.roll(f1, R - s, axis=0))      # rows shifted by +s
        lhs2 = jnp.concatenate(taps, axis=1).astype(jnp.bfloat16)         # (R,512)
        y2 = jnp.dot(lhs2, w2_ref[...], preferred_element_type=jnp.float32)
        y2 = jnp.maximum(y2 + b2_ref[...], 0.0)                           # (R,768)

        # AdaptiveAvgPool2d((1,1)) per sample: drop rows past the conv2 extent
        # and the last pooled column, then a per-sample sublane reduce.
        r = jax.lax.broadcasted_iota(jnp.int32, (R, 1), 0) % M1
        valid = (r < H2 * W1) & (r % W1 != W1 - 1)
        pooled = jnp.sum(jnp.where(valid, y2, 0.0).reshape(B, M1, 768),
                         axis=1) * inv_pool                               # (B,768) f32

        # Linear(768, num_classes) — batched, lane-padded, f32 weights.
        logits = jnp.dot(pooled, wfc_ref[...],
                         preferred_element_type=jnp.float32) + bfc_ref[...]
        out_ref[0] = logits                                               # (B,cls_pad)

    flops = 2 * N_pad * (M1 * K1p * 128 + M1 * 512 * 768) + 2 * N_pad * 768 * cls_pad
    bytes_accessed = (patches.size * 2 + w1f.size * 2 + w2f.size * 2
                      + wfc.size * 4 + (b1f.size + b2f.size + bfc.size) * 4
                      + N_pad * cls_pad * 4)
    cost = pl.CostEstimate(flops=int(flops), transcendentals=0,
                           bytes_accessed=int(bytes_accessed))

    out = pl.pallas_call(
        kernel,
        out_shape=jax.ShapeDtypeStruct((n_steps, B, cls_pad), jnp.float32),
        grid=(n_steps,),
        in_specs=[
            pl.BlockSpec((B, M1, K1p), lambda g: (g, 0, 0)),
            pl.BlockSpec((K1p, 128), lambda g: (0, 0)),
            pl.BlockSpec((1, 128), lambda g: (0, 0)),
            pl.BlockSpec((4 * 128, 768), lambda g: (0, 0)),
            pl.BlockSpec((1, 768), lambda g: (0, 0)),
            pl.BlockSpec((768, cls_pad), lambda g: (0, 0)),
            pl.BlockSpec((1, cls_pad), lambda g: (0, 0)),
        ],
        out_specs=pl.BlockSpec((1, B, cls_pad), lambda g: (g, 0, 0)),
        compiler_params=pltpu.CompilerParams(
            dimension_semantics=("parallel",),
            vmem_limit_bytes=32 * 1024 * 1024),   # > v5e 16 MiB default, < v7x 64 MiB
        cost_estimate=cost,
    )(patches, w1f, b1f, w2f, b2f, wfc, bfc)

    return out.reshape(N_pad, cls_pad)[:N, :num_classes]


def init_params(key, in_channels, num_classes):
    ks = jax.random.split(key, 14)
    p = {}
    p["w_conv1"] = 0.10 * jax.random.normal(ks[0], (in_channels, 128), jnp.float32)
    p["bn1_gamma"] = 1.0 + 0.1 * jax.random.normal(ks[1], (1, 128), jnp.float32)
    p["bn1_beta"] = 0.1 * jax.random.normal(ks[2], (1, 128), jnp.float32)
    p["bn1_mean"] = 0.1 * jax.random.normal(ks[3], (1, 128), jnp.float32)
    p["bn1_var"] = jax.random.uniform(ks[4], (1, 128), jnp.float32, 0.5, 1.5)
    p["w_conv2"] = 0.05 * jax.random.normal(ks[5], (128 * 2 * 2, 768), jnp.float32)
    p["bn2_gamma"] = 1.0 + 0.1 * jax.random.normal(ks[6], (1, 768), jnp.float32)
    p["bn2_beta"] = 0.1 * jax.random.normal(ks[7], (1, 768), jnp.float32)
    p["bn2_mean"] = 0.1 * jax.random.normal(ks[8], (1, 768), jnp.float32)
    p["bn2_var"] = jax.random.uniform(ks[9], (1, 768), jnp.float32, 0.5, 1.5)
    p["w_fc"] = 0.05 * jax.random.normal(ks[10], (768, num_classes), jnp.float32)
    p["b_fc"] = 0.05 * jax.random.normal(ks[11], (1, num_classes), jnp.float32)
    return p


def reference(x, params):
    """Pure-JAX f32 reference of the same forward (inference-mode BN)."""
    def bn(z, g, b, m, v):
        g, b, m, v = (t.reshape(1, -1, 1, 1) for t in (g, b, m, v))
        return (z - m) * jax.lax.rsqrt(v + BN_EPS) * g + b

    hp = jax.lax.Precision.HIGHEST
    r = jnp.maximum(x, 0.0)
    pooled = jax.lax.reduce_window(
        r, 0.0, jax.lax.add, (1, 1, POOL_K, POOL_K), (1, 1, POOL_S, POOL_S), "VALID"
    ) / float(POOL_K * POOL_K)
    y = jnp.einsum("nchw,co->nohw", pooled, params["w_conv1"], precision=hp)
    y = jnp.maximum(bn(y, params["bn1_gamma"], params["bn1_beta"],
                       params["bn1_mean"], params["bn1_var"]), 0.0)
    w2 = params["w_conv2"].reshape(128, 2, 2, 768)
    H2, W2s = y.shape[2] - 1, y.shape[3] - 1
    y2 = jnp.zeros((x.shape[0], 768, H2, W2s), jnp.float32)
    for kh in range(2):
        for kw in range(2):
            y2 = y2 + jnp.einsum("nchw,co->nohw",
                                 y[:, :, kh:kh + H2, kw:kw + W2s],
                                 w2[:, kh, kw, :], precision=hp)
    y2 = jnp.maximum(bn(y2, params["bn2_gamma"], params["bn2_beta"],
                        params["bn2_mean"], params["bn2_var"]), 0.0)
    gap = jnp.mean(y2, axis=(2, 3))                                  # (N, 768)
    return jnp.dot(gap, params["w_fc"], precision=hp) + params["b_fc"]


if __name__ == "__main__":
    key = jax.random.PRNGKey(0)
    kx, kp = jax.random.split(key)

    N, C, H, W = 2, 4, 16, 16      # NCHW input, like the PyTorch module
    num_classes = 10

    x = jax.random.normal(kx, (N, C, H, W), jnp.float32)
    params = init_params(kp, C, num_classes)

    fwd = jax.jit(auxiliary_head_forward)
    out = jax.block_until_ready(fwd(x, params))
    ref = jax.block_until_ready(reference(x, params))

    assert out.shape == (N, num_classes), out.shape
    if not jnp.allclose(out, ref, atol=3e-2, rtol=3e-2):
        raise AssertionError(f"mismatch: max abs err {jnp.max(jnp.abs(out - ref))}")
    print("KERNEL_OK")
</pallas_src>

<mosaic_0001>
module attributes {stable_mosaic.version = 11 : i64} {
  func.func @kernel(%arg0: i32, %arg1: memref<1x16x128xbf16, #tpu.memory_space<vmem>>, %arg2: memref<128x128xbf16, #tpu.memory_space<vmem>>, %arg3: memref<1x128xf32, #tpu.memory_space<vmem>>, %arg4: memref<512x768xbf16, #tpu.memory_space<vmem>>, %arg5: memref<1x768xf32, #tpu.memory_space<vmem>>, %arg6: memref<768x128xf32, #tpu.memory_space<vmem>>, %arg7: memref<1x128xf32, #tpu.memory_space<vmem>>, %arg8: memref<1x1x128xf32, #tpu.memory_space<vmem>>) attributes {dimension_semantics = [#tpu.dimension_semantics<parallel>], iteration_bounds = array<i64: 2>, scalar_prefetch = 0 : i64, scratch_operands = 0 : i64, tpu.core_type = #tpu.core_type<tc>, window_params = [{transform_indices = @transform_0, window_bounds = array<i64: 1, 16, 128>}, {pipeline_mode = #tpu.pipeline_mode<synchronous>, transform_indices = @transform_1, window_bounds = array<i64: 128, 128>}, {pipeline_mode = #tpu.pipeline_mode<synchronous>, transform_indices = @transform_2, window_bounds = array<i64: 1, 128>}, {pipeline_mode = #tpu.pipeline_mode<synchronous>, transform_indices = @transform_3, window_bounds = array<i64: 512, 768>}, {pipeline_mode = #tpu.pipeline_mode<synchronous>, transform_indices = @transform_4, window_bounds = array<i64: 1, 768>}, {pipeline_mode = #tpu.pipeline_mode<synchronous>, transform_indices = @transform_5, window_bounds = array<i64: 768, 128>}, {pipeline_mode = #tpu.pipeline_mode<synchronous>, transform_indices = @transform_6, window_bounds = array<i64: 1, 128>}, {transform_indices = @transform_7, window_bounds = array<i64: 1, 1, 128>}]} {
    %c0 = arith.constant 0 : index
    %c0_0 = arith.constant 0 : index
    %c0_1 = arith.constant 0 : index
    %0 = vector.load %arg1[%c0, %c0_0, %c0_1] : memref<1x16x128xbf16, #tpu.memory_space<vmem>>, vector<1x16x128xbf16>
    %1 = vector.shape_cast %0 : vector<1x16x128xbf16> to vector<16x128xbf16>
    %c0_2 = arith.constant 0 : index
    %c0_3 = arith.constant 0 : index
    %2 = vector.load %arg2[%c0_2, %c0_3] : memref<128x128xbf16, #tpu.memory_space<vmem>>, vector<128x128xbf16>
    %cst = arith.constant dense<0.000000e+00> : vector<16x128xf32>
    %3 = tpu.matmul %1, %2, %cst {dimension_numbers = #tpu.dot_dimension_numbers<[1], [0], [0], [1], [0, 0, 1, 1], [], []>} : vector<16x128xbf16>, vector<128x128xbf16>, vector<16x128xf32> -> vector<16x128xf32>
    %c0_4 = arith.constant 0 : index
    %c0_5 = arith.constant 0 : index
    %4 = vector.load %arg3[%c0_4, %c0_5] : memref<1x128xf32, #tpu.memory_space<vmem>>, vector<1x128xf32>
    %5 = vector.broadcast %4 : vector<1x128xf32> to vector<16x128xf32>
    %6 = arith.addf %3, %5 : vector<16x128xf32>
    %cst_6 = arith.constant 0.000000e+00 : f32
    %7 = vector.broadcast %cst_6 : f32 to vector<16x128xf32>
    %8 = arith.maximumf %6, %7 : vector<16x128xf32>
    %c15_i32 = arith.constant 15 : i32
    %9 = tpu.dynamic_rotate %8 by %c15_i32 dim 0 : vector<16x128xf32>, i32 -> vector<16x128xf32>
    %c12_i32 = arith.constant 12 : i32
    %10 = tpu.dynamic_rotate %8 by %c12_i32 dim 0 : vector<16x128xf32>, i32 -> vector<16x128xf32>
    %c11_i32 = arith.constant 11 : i32
    %11 = tpu.dynamic_rotate %8 by %c11_i32 dim 0 : vector<16x128xf32>, i32 -> vector<16x128xf32>
    %12 = tpu.concatenate %8, %9, %10, %11 in 1 : vector<16x128xf32>, vector<16x128xf32>, vector<16x128xf32>, vector<16x128xf32> -> vector<16x512xf32>
    %13 = arith.truncf %12 : vector<16x512xf32> to vector<16x512xbf16>
    %c0_7 = arith.constant 0 : index
    %c0_8 = arith.constant 0 : index
    %14 = vector.load %arg4[%c0_7, %c0_8] : memref<512x768xbf16, #tpu.memory_space<vmem>>, vector<512x768xbf16>
    %cst_9 = arith.constant dense<0.000000e+00> : vector<16x768xf32>
    %15 = tpu.matmul %13, %14, %cst_9 {dimension_numbers = #tpu.dot_dimension_numbers<[1], [0], [0], [1], [0, 0, 1, 1], [], []>} : vector<16x512xbf16>, vector<512x768xbf16>, vector<16x768xf32> -> vector<16x768xf32>
    %c0_10 = arith.constant 0 : index
    %c0_11 = arith.constant 0 : index
    %16 = vector.load %arg5[%c0_10, %c0_11] : memref<1x768xf32, #tpu.memory_space<vmem>>, vector<1x768xf32>
    %17 = vector.broadcast %16 : vector<1x768xf32> to vector<16x768xf32>
    %18 = arith.addf %15, %17 : vector<16x768xf32>
    %cst_12 = arith.constant 0.000000e+00 : f32
    %19 = vector.broadcast %cst_12 : f32 to vector<16x768xf32>
    %20 = arith.maximumf %18, %19 : vector<16x768xf32>
    %21 = tpu.iota {dimensions = array<i32: 0>} : vector<16x1xi32>
    %c16_i32 = arith.constant 16 : i32
    %c0_i32 = arith.constant 0 : i32
    %22 = arith.cmpi eq, %c16_i32, %c0_i32 : i32
    %c1_i32 = arith.constant 1 : i32
    %23 = arith.select %22, %c1_i32, %c16_i32 : i32
    %24 = vector.broadcast %23 : i32 to vector<16x1xi32>
    %25 = arith.remsi %21, %24 : vector<16x1xi32>
    %c0_i32_13 = arith.constant 0 : i32
    %26 = vector.broadcast %c0_i32_13 : i32 to vector<16x1xi32>
    %27 = arith.cmpi ne, %25, %26 : vector<16x1xi32>
    %c0_i32_14 = arith.constant 0 : i32
    %28 = vector.broadcast %c0_i32_14 : i32 to vector<16x1xi32>
    %29 = arith.cmpi slt, %25, %28 : vector<16x1xi32>
    %c0_i32_15 = arith.constant 0 : i32
    %30 = arith.cmpi slt, %23, %c0_i32_15 : i32
    %31 = vector.broadcast %30 : i1 to vector<16x1xi1>
    %32 = vector.broadcast %31 : vector<16x1xi1> to vector<16x1xi1>
    %33 = arith.xori %29, %32 : vector<16x1xi1>
    %34 = arith.andi %33, %27 : vector<16x1xi1>
    %35 = vector.broadcast %23 : i32 to vector<16x1xi32>
    %36 = arith.addi %25, %35 : vector<16x1xi32>
    %37 = arith.select %34, %36, %25 : vector<16x1xi1>, vector<16x1xi32>
    %c12_i32_16 = arith.constant 12 : i32
    %38 = vector.broadcast %c12_i32_16 : i32 to vector<16x1xi32>
    %39 = arith.cmpi slt, %37, %38 : vector<16x1xi32>
    %c4_i32 = arith.constant 4 : i32
    %c0_i32_17 = arith.constant 0 : i32
    %40 = arith.cmpi eq, %c4_i32, %c0_i32_17 : i32
    %c1_i32_18 = arith.constant 1 : i32
    %41 = arith.select %40, %c1_i32_18, %c4_i32 : i32
    %42 = vector.broadcast %41 : i32 to vector<16x1xi32>
    %43 = arith.remsi %37, %42 : vector<16x1xi32>
    %c0_i32_19 = arith.constant 0 : i32
    %44 = vector.broadcast %c0_i32_19 : i32 to vector<16x1xi32>
    %45 = arith.cmpi ne, %43, %44 : vector<16x1xi32>
    %c0_i32_20 = arith.constant 0 : i32
    %46 = vector.broadcast %c0_i32_20 : i32 to vector<16x1xi32>
    %47 = arith.cmpi slt, %43, %46 : vector<16x1xi32>
    %c0_i32_21 = arith.constant 0 : i32
    %48 = arith.cmpi slt, %41, %c0_i32_21 : i32
    %49 = vector.broadcast %48 : i1 to vector<16x1xi1>
    %50 = vector.broadcast %49 : vector<16x1xi1> to vector<16x1xi1>
    %51 = arith.xori %47, %50 : vector<16x1xi1>
    %52 = arith.andi %51, %45 : vector<16x1xi1>
    %53 = vector.broadcast %41 : i32 to vector<16x1xi32>
    %54 = arith.addi %43, %53 : vector<16x1xi32>
    %55 = arith.select %52, %54, %43 : vector<16x1xi1>, vector<16x1xi32>
    %c3_i32 = arith.constant 3 : i32
    %56 = vector.broadcast %c3_i32 : i32 to vector<16x1xi32>
    %57 = arith.cmpi ne, %55, %56 : vector<16x1xi32>
    %58 = arith.andi %39, %57 : vector<16x1xi1>
    %cst_22 = arith.constant 0.000000e+00 : f32
    %59 = vector.shape_cast %58 : vector<16x1xi1> to vector<16x1xi1>
    %60 = vector.broadcast %59 : vector<16x1xi1> to vector<16x768xi1>
    %61 = vector.broadcast %cst_22 : f32 to vector<16x768xf32>
    %62 = arith.select %60, %20, %61 : vector<16x768xi1>, vector<16x768xf32>
    %63 = vector.shape_cast %62 : vector<16x768xf32> to vector<1x16x768xf32>
    %cst_23 = arith.constant dense<0.000000e+00> : vector<1x768xf32>
    %64 = vector.multi_reduction <add>, %63, %cst_23 [1] : vector<1x16x768xf32> to vector<1x768xf32>
    %cst_24 = arith.constant 0.111111112 : f32
    %65 = vector.broadcast %cst_24 : f32 to vector<1x768xf32>
    %66 = arith.mulf %64, %65 : vector<1x768xf32>
    %c0_25 = arith.constant 0 : index
    %c0_26 = arith.constant 0 : index
    %67 = vector.load %arg6[%c0_25, %c0_26] : memref<768x128xf32, #tpu.memory_space<vmem>>, vector<768x128xf32>
    %cst_27 = arith.constant dense<0.000000e+00> : vector<1x128xf32>
    %68 = tpu.matmul %66, %67, %cst_27 {dimension_numbers = #tpu.dot_dimension_numbers<[1], [0], [0], [1], [0, 0, 1, 1], [], []>} : vector<1x768xf32>, vector<768x128xf32>, vector<1x128xf32> -> vector<1x128xf32>
    %c0_28 = arith.constant 0 : index
    %c0_29 = arith.constant 0 : index
    %69 = vector.load %arg7[%c0_28, %c0_29] : memref<1x128xf32, #tpu.memory_space<vmem>>, vector<1x128xf32>
    %70 = arith.addf %68, %69 : vector<1x128xf32>
    %c0_30 = arith.constant 0 : index
    %c0_31 = arith.constant 0 : index
    %c0_32 = arith.constant 0 : index
    %71 = vector.load %arg8[%c0_30, %c0_31, %c0_32] : memref<1x1x128xf32, #tpu.memory_space<vmem>>, vector<1x1x128xf32>
    %72 = vector.shape_cast %71 : vector<1x1x128xf32> to vector<1x128xf32>
    %73 = vector.shape_cast %70 : vector<1x128xf32> to vector<1x1x128xf32>
    tpu.vector_store %arg8[%c0_30, %c0_31, %c0_32], %73 {strides = array<i32>} : memref<1x1x128xf32, #tpu.memory_space<vmem>>, vector<1x1x128xf32>,
    return
  }
  func.func @transform_0(%arg0: i32) -> (i32, i32, i32) {
    %c0_i32 = arith.constant 0 : i32
    %c0_i32_0 = arith.constant 0 : i32
    %c0_i32_1 = arith.constant 0 : i32
    return %arg0, %c0_i32, %c0_i32_0 : i32, i32, i32
  }
  func.func @transform_1(%arg0: i32) -> (i32, i32) {
    %c0_i32 = arith.constant 0 : i32
    %c0_i32_0 = arith.constant 0 : i32
    %c0_i32_1 = arith.constant 0 : i32
    return %c0_i32, %c0_i32_0 : i32, i32
  }
  func.func @transform_2(%arg0: i32) -> (i32, i32) {
    %c0_i32 = arith.constant 0 : i32
    %c0_i32_0 = arith.constant 0 : i32
    %c0_i32_1 = arith.constant 0 : i32
    return %c0_i32, %c0_i32_0 : i32, i32
  }
  func.func @transform_3(%arg0: i32) -> (i32, i32) {
    %c0_i32 = arith.constant 0 : i32
    %c0_i32_0 = arith.constant 0 : i32
    %c0_i32_1 = arith.constant 0 : i32
    return %c0_i32, %c0_i32_0 : i32, i32
  }
  func.func @transform_4(%arg0: i32) -> (i32, i32) {
    %c0_i32 = arith.constant 0 : i32
    %c0_i32_0 = arith.constant 0 : i32
    %c0_i32_1 = arith.constant 0 : i32
    return %c0_i32, %c0_i32_0 : i32, i32
  }
  func.func @transform_5(%arg0: i32) -> (i32, i32) {
    %c0_i32 = arith.constant 0 : i32
    %c0_i32_0 = arith.constant 0 : i32
    %c0_i32_1 = arith.constant 0 : i32
    return %c0_i32, %c0_i32_0 : i32, i32
  }
  func.func @transform_6(%arg0: i32) -> (i32, i32) {
    %c0_i32 = arith.constant 0 : i32
    %c0_i32_0 = arith.constant 0 : i32
    %c0_i32_1 = arith.constant 0 : i32
    return %c0_i32, %c0_i32_0 : i32, i32
  }
  func.func @transform_7(%arg0: i32) -> (i32, i32, i32) {
    %c0_i32 = arith.constant 0 : i32
    %c0_i32_0 = arith.constant 0 : i32
    %c0_i32_1 = arith.constant 0 : i32
    return %arg0, %c0_i32, %c0_i32_0 : i32, i32, i32
  }
}

</mosaic_0001>

<llo_original>
// kernel: auxiliary_head_forward.1
$region0: #{auxiliary_head_forward.1}
  #allocation0 [shape = 'u32[]', space=smem, size = 0x4, offset = 0x4, fixed_abs, tag = 'smem constant byte address 0x4 - core index']
  #allocation1 [shape = 'u32[144,128]{1,0:T(1,128)}', space=vmem, size = 0x12000, scoped, tag = 'internal scratch']
  %s0 = inlined_call_operand.vmem [shape: bf16[2,16,128], index: 0, kind: input, shape index: {}]
  %s1 = inlined_call_operand.vmem [shape: bf16[128,128], index: 1, kind: input, shape index: {}]
  %s2 = inlined_call_operand.vmem [shape: f32[1,128], index: 2, kind: input, shape index: {}]
  %s3 = inlined_call_operand.vmem [shape: bf16[512,768], index: 3, kind: input, shape index: {}]
  %s4 = inlined_call_operand.vmem [shape: f32[1,768], index: 4, kind: input, shape index: {}]
  %s5 = inlined_call_operand.vmem [shape: f32[768,128], index: 5, kind: input, shape index: {}]
  %s6 = inlined_call_operand.vmem [shape: f32[1,128], index: 6, kind: input, shape index: {}]
  %s7 = inlined_call_operand.hbm [shape: f32[2,1,128], index: 7, kind: output, shape index: {}]
  %s8 = sld [smem:[#allocation0]]
  $region61: #{auxiliary_head_forward.1} parent=0
    _
  %s10 = ssub.s32 1, %s8
  %s11 = scalar_select 0, %s10, %s8
  $region1: #{auxiliary_head_forward.1} parent=0
    #allocation2 [shape = 'u8[1024]{0}', space=vmem, size = 0x400, scoped, tag = 'output window, operand 0']
    #allocation3 [shape = 's32[2]{0}', space=sflag, size = 0x8, scoped, tag = 'scoped memory for auxiliary_head_forward.1']
    %12 = vsyncpa [#allocation3], 0
    %s13 = scalar_lea.sflag [#allocation3], 1
    %14 = vsyncpa %s13, 0
    loop: start=0, step=1, limit=4
    $region2: #{auxiliary_head_forward.1} parent=1 // loop_pre_header
      _
    $region3: #{auxiliary_head_forward.1} parent=1 // loop_header
      %s16 = sphi 0, %s20
      %p17 = scmp.ge.s32.totalorder %s16, 4
      %s26 = sphi 0, %s28
      %s29 = sphi 0, %s26
      %s30 = sphi 0, %s29
      %s46 = sphi 0, %s30
      %s50 = sphi 0, %s50
      %s52 = sphi 0, %s50
      %s53 = sphi 0, %s52
      %s67 = sphi 0, %s53
      %s71 = sphi 0, %s71
      %s73 = sphi 0, %s71
      %s74 = sphi 0, %s73
      %s88 = sphi 0, %s74
      %s92 = sphi 0, %s92
      %s94 = sphi 0, %s92
      %s95 = sphi 0, %s94
      %s109 = sphi 0, %s95
      %s113 = sphi 0, %s113
      %s115 = sphi 0, %s113
      %s116 = sphi 0, %s115
      %s130 = sphi 0, %s116
      %s134 = sphi 0, %s134
      %s136 = sphi 0, %s134
      %s137 = sphi 0, %s136
      %s151 = sphi 0, %s137
      %s155 = sphi 0, %s155
      %s157 = sphi 0, %s155
      %s158 = sphi 0, %s157
      %s172 = sphi 0, %s158
      %s178 = sphi 0, %s180
      %s181 = sphi 0, %s178
      %s182 = sphi 0, %s181
      %s198 = sphi 0, %s182
    $region4: #{auxiliary_head_forward.1} parent=1 // loop_header_branch
      %19 = sbr.rel (%p17) target = $region8
    $region5: #{auxiliary_head_forward.1} parent=1 // loop_body
      %s21 = ssub.s32 %s16, 1
      %s22 = ssub.s32 %s16, 2
      %s23 = sadd.s32 %s16, 1
      %s24 = ssub.s32 %s16, %s23
      %p25 = scmp.eq.s32.totalorder %s24, 0
      %s27 = sadd.s32 %s26, 1
      %s28 = scalar_select %p25, %s26, %s27
      %p31 = pneg %p25
      %p32 = scmp.eq.s32.totalorder %s16, 1
      %p33 = por %p31, %p32
      %p34 = scmp.ne.s32.totalorder %s26, %s29
      %p35 = scmp.eq.s32.totalorder %s16, 0
      %p36 = por %p34, %p35
      %p37 = scmp.ne.s32.totalorder %s26, %s29
      %p38 = scmp.eq.s32.totalorder %s21, 1
      %p39 = por %p37, %p38
      %p40 = scmp.ne.s32.totalorder %s29, %s30
      %p41 = scmp.eq.s32.totalorder %s21, 0
      %p42 = por %p40, %p41
      %p43 = scmp.ne.s32.totalorder %s29, %s30
      %p44 = scmp.eq.s32.totalorder %s22, 1
      %p45 = por %p43, %p44
      %p47 = scmp.ne.s32.totalorder %s30, %s46
      %p48 = scmp.eq.s32.totalorder %s22, 0
      %p49 = por %p47, %p48
      %s51 = sadd.s32 %s50, 1
      %p54 = scmp.eq.s32.totalorder %s16, 1
      %p55 = scmp.ne.s32.totalorder %s50, %s52
      %p56 = scmp.eq.s32.totalorder %s16, 0
      %p57 = por %p55, %p56
      %p58 = scmp.ne.s32.totalorder %s50, %s52
      %p59 = scmp.eq.s32.totalorder %s21, 1
      %p60 = por %p58, %p59
      %p61 = scmp.ne.s32.totalorder %s52, %s53
      %p62 = scmp.eq.s32.totalorder %s21, 0
      %p63 = por %p61, %p62
      %p64 = scmp.ne.s32.totalorder %s52, %s53
      %p65 = scmp.eq.s32.totalorder %s22, 1
      %p66 = por %p64, %p65
      %p68 = scmp.ne.s32.totalorder %s53, %s67
      %p69 = scmp.eq.s32.totalorder %s22, 0
      %p70 = por %p68, %p69
      %s72 = sadd.s32 %s71, 1
      %p75 = scmp.eq.s32.totalorder %s16, 1
      %p76 = scmp.ne.s32.totalorder %s71, %s73
      %p77 = scmp.eq.s32.totalorder %s16, 0
      %p78 = por %p76, %p77
      %p79 = scmp.ne.s32.totalorder %s71, %s73
      %p80 = scmp.eq.s32.totalorder %s21, 1
      %p81 = por %p79, %p80
      %p82 = scmp.ne.s32.totalorder %s73, %s74
      %p83 = scmp.eq.s32.totalorder %s21, 0
      %p84 = por %p82, %p83
      %p85 = scmp.ne.s32.totalorder %s73, %s74
      %p86 = scmp.eq.s32.totalorder %s22, 1
      %p87 = por %p85, %p86
      %p89 = scmp.ne.s32.totalorder %s74, %s88
      %p90 = scmp.eq.s32.totalorder %s22, 0
      %p91 = por %p89, %p90
      %s93 = sadd.s32 %s92, 1
      %p96 = scmp.eq.s32.totalorder %s16, 1
      %p97 = scmp.ne.s32.totalorder %s92, %s94
      %p98 = scmp.eq.s32.totalorder %s16, 0
      %p99 = por %p97, %p98
      %p100 = scmp.ne.s32.totalorder %s92, %s94
      %p101 = scmp.eq.s32.totalorder %s21, 1
      %p102 = por %p100, %p101
      %p103 = scmp.ne.s32.totalorder %s94, %s95
      %p104 = scmp.eq.s32.totalorder %s21, 0
      %p105 = por %p103, %p104
      %p106 = scmp.ne.s32.totalorder %s94, %s95
      %p107 = scmp.eq.s32.totalorder %s22, 1
      %p108 = por %p106, %p107
      %p110 = scmp.ne.s32.totalorder %s95, %s109
      %p111 = scmp.eq.s32.totalorder %s22, 0
      %p112 = por %p110, %p111
      %s114 = sadd.s32 %s113, 1
      %p117 = scmp.eq.s32.totalorder %s16, 1
      %p118 = scmp.ne.s32.totalorder %s113, %s115
      %p119 = scmp.eq.s32.totalorder %s16, 0
      %p120 = por %p118, %p119
      %p121 = scmp.ne.s32.totalorder %s113, %s115
      %p122 = scmp.eq.s32.totalorder %s21, 1
      %p123 = por %p121, %p122
      %p124 = scmp.ne.s32.totalorder %s115, %s116
      %p125 = scmp.eq.s32.totalorder %s21, 0
      %p126 = por %p124, %p125
      %p127 = scmp.ne.s32.totalorder %s115, %s116
      %p128 = scmp.eq.s32.totalorder %s22, 1
      %p129 = por %p127, %p128
      %p131 = scmp.ne.s32.totalorder %s116, %s130
      %p132 = scmp.eq.s32.totalorder %s22, 0
      %p133 = por %p131, %p132
      %s135 = sadd.s32 %s134, 1
      %p138 = scmp.eq.s32.totalorder %s16, 1
      %p139 = scmp.ne.s32.totalorder %s134, %s136
      %p140 = scmp.eq.s32.totalorder %s16, 0
      %p141 = por %p139, %p140
      %p142 = scmp.ne.s32.totalorder %s134, %s136
      %p143 = scmp.eq.s32.totalorder %s21, 1
      %p144 = por %p142, %p143
      %p145 = scmp.ne.s32.totalorder %s136, %s137
      %p146 = scmp.eq.s32.totalorder %s21, 0
      %p147 = por %p145, %p146
      %p148 = scmp.ne.s32.totalorder %s136, %s137
      %p149 = scmp.eq.s32.totalorder %s22, 1
      %p150 = por %p148, %p149
      %p152 = scmp.ne.s32.totalorder %s137, %s151
      %p153 = scmp.eq.s32.totalorder %s22, 0
      %p154 = por %p152, %p153
      %s156 = sadd.s32 %s155, 1
      %p159 = scmp.eq.s32.totalorder %s16, 1
      %p160 = scmp.ne.s32.totalorder %s155, %s157
      %p161 = scmp.eq.s32.totalorder %s16, 0
      %p162 = por %p160, %p161
      %p163 = scmp.ne.s32.totalorder %s155, %s157
      %p164 = scmp.eq.s32.totalorder %s21, 1
      %p165 = por %p163, %p164
      %p166 = scmp.ne.s32.totalorder %s157, %s158
      %p167 = scmp.eq.s32.totalorder %s21, 0
      %p168 = por %p166, %p167
      %p169 = scmp.ne.s32.totalorder %s157, %s158
      %p170 = scmp.eq.s32.totalorder %s22, 1
      %p171 = por %p169, %p170
      %p173 = scmp.ne.s32.totalorder %s158, %s172
      %p174 = scmp.eq.s32.totalorder %s22, 0
      %p175 = por %p173, %p174
      %s176 = ssub.s32 %s16, %s23
      %p177 = scmp.eq.s32.totalorder %s176, 0
      %s179 = sadd.s32 %s178, 1
      %s180 = scalar_select %p177, %s178, %s179
      %p183 = pneg %p177
      %p184 = scmp.eq.s32.totalorder %s16, 1
      %p185 = por %p183, %p184
      %p186 = scmp.ne.s32.totalorder %s178, %s181
      %p187 = scmp.eq.s32.totalorder %s16, 0
      %p188 = por %p186, %p187
      %p189 = scmp.ne.s32.totalorder %s178, %s181
      %p190 = scmp.eq.s32.totalorder %s21, 1
      %p191 = por %p189, %p190
      %p192 = scmp.ne.s32.totalorder %s181, %s182
      %p193 = scmp.eq.s32.totalorder %s21, 0
      %p194 = por %p192, %p193
      %p195 = scmp.ne.s32.totalorder %s181, %s182
      %p196 = scmp.eq.s32.totalorder %s22, 1
      %p197 = por %p195, %p196
      %p199 = scmp.ne.s32.totalorder %s182, %s198
      %p200 = scmp.eq.s32.totalorder %s22, 0
      %p201 = por %p199, %p200
      %p202 = scmp.le.s32.totalorder 1, %s16
      %p203 = scmp.lt.s32.totalorder %s16, 3
      %p204 = pnand %p202, %p203
      %p205 = pneg %p204
      // Predicated region
      $region9: #{auxiliary_head_forward.1} parent=5 // pred_check
        _
      $region10: #{auxiliary_head_forward.1} parent=5 // pred_check_branch
        %207 = sbr.rel (%p204) target = $region12
      $region11: #{auxiliary_head_forward.1} parent=5 // pred_region
        %s208 = ssub.s32 %s16, 1
        // Predicated region
        $region13: #{auxiliary_head_forward.1} parent=11 // pred_check
          %p209 = pneg %p63
        $region14: #{auxiliary_head_forward.1} parent=11 // pred_check_branch
          %211 = sbr.rel (%p209) target = $region16
        $region15: #{auxiliary_head_forward.1} parent=11 // pred_region
          _
        $region16: #{auxiliary_head_forward.1} parent=11 // pred_fallthru
          _
        // Predicated region
        $region17: #{auxiliary_head_forward.1} parent=11 // pred_check
          %p212 = pneg %p84
        $region18: #{auxiliary_head_forward.1} parent=11 // pred_check_branch
          %214 = sbr.rel (%p212) target = $region20
        $region19: #{auxiliary_head_forward.1} parent=11 // pred_region
          _
        $region20: #{auxiliary_head_forward.1} parent=11 // pred_fallthru
          _
        // Predicated region
        $region21: #{auxiliary_head_forward.1} parent=11 // pred_check
          %p215 = pneg %p105
        $region22: #{auxiliary_head_forward.1} parent=11 // pred_check_branch
          %217 = sbr.rel (%p215) target = $region24
        $region23: #{auxiliary_head_forward.1} parent=11 // pred_region
          _
        $region24: #{auxiliary_head_forward.1} parent=11 // pred_fallthru
          _
        // Predicated region
        $region25: #{auxiliary_head_forward.1} parent=11 // pred_check
          %p218 = pneg %p126
        $region26: #{auxiliary_head_forward.1} parent=11 // pred_check_branch
          %220 = sbr.rel (%p218) target = $region28
        $region27: #{auxiliary_head_forward.1} parent=11 // pred_region
          _
        $region28: #{auxiliary_head_forward.1} parent=11 // pred_fallthru
          _
        // Predicated region
        $region29: #{auxiliary_head_forward.1} parent=11 // pred_check
          %p221 = pneg %p147
        $region30: #{auxiliary_head_forward.1} parent=11 // pred_check_branch
          %223 = sbr.rel (%p221) target = $region32
        $region31: #{auxiliary_head_forward.1} parent=11 // pred_region
          _
        $region32: #{auxiliary_head_forward.1} parent=11 // pred_fallthru
          _
        // Predicated region
        $region33: #{auxiliary_head_forward.1} parent=11 // pred_check
          %p224 = pneg %p168
        $region34: #{auxiliary_head_forward.1} parent=11 // pred_check_branch
          %226 = sbr.rel (%p224) target = $region36
        $region35: #{auxiliary_head_forward.1} parent=11 // pred_region
          _
        $region36: #{auxiliary_head_forward.1} parent=11 // pred_fallthru
          _
      $region12: #{auxiliary_head_forward.1} parent=5 // pred_fallthru
        _
      %p227 = scmp.lt.s32.totalorder %s16, 2
      // Predicated region
      $region37: #{auxiliary_head_forward.1} parent=5 // pred_check
        %p228 = pneg %p227
      $region38: #{auxiliary_head_forward.1} parent=5 // pred_check_branch
        %230 = sbr.rel (%p228) target = $region40
      $region39: #{auxiliary_head_forward.1} parent=5 // pred_region
        // Predicated region
        $region41: #{auxiliary_head_forward.1} parent=39 // pred_check
          %p231 = pneg %p36
        $region42: #{auxiliary_head_forward.1} parent=39 // pred_check_branch
          %233 = sbr.rel (%p231) target = $region44
        $region43: #{auxiliary_head_forward.1} parent=39 // pred_region
          %p234 = scmp.lt.s32.totalorder %s16, 1
          %s235 = scalar_select %p234, %s16, 1
          %s236 = smul.addr %s235, 2
          %s237 = smul.addr %s236, 4
          %s238 = scalar_lea.vmem %s0, %s237
        $region44: #{auxiliary_head_forward.1} parent=39 // pred_fallthru
          _
      $region40: #{auxiliary_head_forward.1} parent=5 // pred_fallthru
        _
      %p239 = scmp.le.s32.totalorder 1, %s16
      %p240 = scmp.lt.s32.totalorder %s16, 3
      %p241 = pnand %p239, %p240
      %p242 = pneg %p241
      // Predicated region
      $region45: #{auxiliary_head_forward.1} parent=5 // pred_check
        _
      $region46: #{auxiliary_head_forward.1} parent=5 // pred_check_branch
        %244 = sbr.rel (%p241) target = $region48
      $region47: #{auxiliary_head_forward.1} parent=5 // pred_region
        %s245 = ssub.s32 %s16, 1
        %p246 = scmp.lt.s32.totalorder %s21, 1
        %s247 = scalar_select %p246, %s21, 1
        %s248 = smul.addr %s247, 2
        %s249 = smul.addr %s248, 4
        %s250 = scalar_lea.vmem %s0, %s249
        %p251 = pneg %p42
        %p252 = pneg %p39
        %p253 = pneg %p63
        %p254 = pneg %p60
        %p255 = pneg %p84
        %p256 = pneg %p81
        %p257 = pneg %p105
        %p258 = pneg %p102
        %p259 = pneg %p126
        %p260 = pneg %p123
        %p261 = pneg %p147
        %p262 = pneg %p144
        %p263 = pneg %p168
        %p264 = pneg %p165
        %p265 = pneg %p194
        %p266 = pneg %p191
        %s267 = sand.u32 %s181, 1
        %s268 = scalar_lea.sflag [#allocation3], %s267
        %s269 = sand.u32 %s181, 1
        %s270 = scalar_lea.vmem [#allocation2], %s269
        %p271 = scmp.lt.s32.totalorder %s21, 1
        %s272 = scalar_select %p271, %s21, 1
        %s273 = smul.addr %s272, 2
        %s274 = smul.addr %s273, 4
        %s275 = scalar_lea.vmem %s0, %s274
        %v277 = vld [vmem:[%s275] sm:$0xf]
        %v278 = vld [vmem:[%s275 + $0x4] sm:$0xf]
        %v279 = vld [vmem:[%s1] sm:$0xf]
        %v280 = vld [vmem:[%s1 + $0x4] sm:$0xf]
        %v281 = vld [vmem:[%s1 + $0x8] sm:$0xf]
        %v282 = vld [vmem:[%s1 + $0xc] sm:$0xf]
        %v283 = vld [vmem:[%s1 + $0x10] sm:$0xf]
        %v284 = vld [vmem:[%s1 + $0x14] sm:$0xf]
        %v285 = vld [vmem:[%s1 + $0x18] sm:$0xf]
        %v286 = vld [vmem:[%s1 + $0x1c] sm:$0xf]
        %v287 = vld [vmem:[%s1 + $0x20] sm:$0xf]
        %v288 = vld [vmem:[%s1 + $0x24] sm:$0xf]
        %v289 = vld [vmem:[%s1 + $0x28] sm:$0xf]
        %v290 = vld [vmem:[%s1 + $0x2c] sm:$0xf]
        %v291 = vld [vmem:[%s1 + $0x30] sm:$0xf]
        %v292 = vld [vmem:[%s1 + $0x34] sm:$0xf]
        %v293 = vld [vmem:[%s1 + $0x38] sm:$0xf]
        %v294 = vld [vmem:[%s1 + $0x3c] sm:$0xf]
        %v295 = vld [vmem:[%s2] sm:$0x1]
        %v297 = vlaneseq
        %v298 = vshrl.u32 %v297, 7
        %v299 = vsub.s32 0, %v298
        %v300 = vrot.slane %v295, %v299
        %v304 = vunpack.c.l.b16 %v277
        %v305 = vunpack.c.l.b16 %v278
        %v306 = vpack.c.b16 %v305, %v304
        %v324 = vunpack.c.l.b16 %v279
        %v325 = vunpack.c.l.b16 %v280
        %v326 = vunpack.c.l.b16 %v281
        %v327 = vunpack.c.l.b16 %v282
        %v328 = vunpack.c.l.b16 %v283
        %v329 = vunpack.c.l.b16 %v284
        %v330 = vunpack.c.l.b16 %v285
        %v331 = vunpack.c.l.b16 %v286
        %v332 = vunpack.c.l.b16 %v287
        %v333 = vunpack.c.l.b16 %v288
        %v334 = vunpack.c.l.b16 %v289
        %v335 = vunpack.c.l.b16 %v290
        %v336 = vunpack.c.l.b16 %v291
        %v337 = vunpack.c.l.b16 %v292
        %v338 = vunpack.c.l.b16 %v293
        %v339 = vunpack.c.l.b16 %v294
        %v340 = vpack.c.b16 %v325, %v324
        %v341 = vpack.c.b16 %v327, %v326
        %v342 = vpack.c.b16 %v329, %v328
        %v343 = vpack.c.b16 %v331, %v330
        %v344 = vpack.c.b16 %v333, %v332
        %v345 = vpack.c.b16 %v335, %v334
        %v346 = vpack.c.b16 %v337, %v336
        %v347 = vpack.c.b16 %v339, %v338
        %356 = vmatprep.subr.bf16.mxu0 0
        %357 = vmatpush1.bf16.msra.mxu0 %v340
        %358 = vmatprep.subr.bf16.mxu0 0
        %359 = vmatpush1.bf16.msra.mxu0 %v341
        %360 = vmatprep.subr.bf16.mxu0 0
        %361 = vmatpush1.bf16.msra.mxu0 %v342
        %362 = vmatprep.subr.bf16.mxu0 0
        %363 = vmatpush1.bf16.msra.mxu0 %v343
        %364 = vmatprep.subr.bf16.mxu0 0
        %365 = vmatpush1.bf16.msra.mxu0 %v344
        %366 = vmatprep.subr.bf16.mxu0 0
        %367 = vmatpush1.bf16.msra.mxu0 %v345
        %368 = vmatprep.subr.bf16.mxu0 0
        %369 = vmatpush1.bf16.msra.mxu0 %v346
        %370 = vmatprep.subr.bf16.mxu0 0
        %371 = vmatpush1.bf16.msra.mxu0 %v347
        %372 = vmatprep.subr.bf16.mxu0 0
        %373 = vmatpush1.bf16.msra.mxu0 0
        %374 = vmatprep.subr.bf16.mxu0 0
        %375 = vmatpush1.bf16.msra.mxu0 0
        %376 = vmatprep.subr.bf16.mxu0 0
        %377 = vmatpush1.bf16.msra.mxu0 0
        %378 = vmatprep.subr.bf16.mxu0 0
        %379 = vmatpush1.bf16.msra.mxu0 0
        %380 = vmatprep.subr.bf16.mxu0 0
        %381 = vmatpush1.bf16.msra.mxu0 0
        %382 = vmatprep.subr.bf16.mxu0 0
        %383 = vmatpush1.bf16.msra.mxu0 0
        %384 = vmatprep.subr.bf16.mxu0 0
        %385 = vmatpush1.bf16.msra.mxu0 0
        %386 = vmatprep.subr.bf16.mxu0 0
        %387 = vmatpush1.bf16.msra.mxu0 0
        %388 = vmatprep.mubr.bf16.mxu0 0
        %389 = vmatmul.mubr.bf16.gmra.mrb[0].mxu0 %v306
        %v390 = vpop.f32.mrb[0].mxu0
        %v391 = vadd.f32 %v300, %v390
        %v392 = vpop.f32.mrb[0].mxu0
        %v393 = vpop.f32.mrb[0].mxu0
        %v394 = vadd.f32 %v300, %v393
        %v395 = vpop.f32.mrb[0].mxu0
        %396 = vdwg.mxu0
        %v397 = vmax.f32 %v391, 0.0
        %v398 = vmax.f32 %v394, 0.0
        %v399 = vrot.slane %v397, 1
        %v400 = vrot.slane %v398, 1
        %v401 = vlaneseq
        %v402 = vshrl.u32 %v401, 7
        %vm403 = vcmp.lt.s32.totalorder %v402, 7
        %v404 = vsel %vm403, %v399, %v400
        %v405 = vsel %vm403, %v400, %v399
        %v406 = vrot.slane %v397, 4
        %v407 = vrot.slane %v398, 4
        %vm408 = vcmp.lt.s32.totalorder %v402, 4
        %v409 = vsel %vm408, %v406, %v407
        %v410 = vsel %vm408, %v407, %v406
        %v411 = vrot.slane %v397, 5
        %v412 = vrot.slane %v398, 5
        %vm413 = vcmp.lt.s32.totalorder %v402, 3
        %v414 = vsel %vm413, %v411, %v412
        %v415 = vsel %vm413, %v412, %v411
        %v416 = vpack.c.bf16 %v398, %v397
        %v417 = vpack.c.bf16 %v405, %v404
        %v418 = vpack.c.bf16 %v410, %v409
        %v419 = vpack.c.bf16 %v415, %v414
        %v420 = vld [vmem:[%s3] sm:$0xff]
        %v421 = vld [vmem:[%s3 + $0x8] sm:$0xff]
        %v422 = vld [vmem:[%s3 + $0x10] sm:$0xff]
        %v423 = vld [vmem:[%s3 + $0x18] sm:$0xff]
        %v424 = vld [vmem:[%s3 + $0x20] sm:$0xff]
        %v425 = vld [vmem:[%s3 + $0x28] sm:$0xff]
        %v426 = vld [vmem:[%s3 + $0x30] sm:$0xff]
        %v427 = vld [vmem:[%s3 + $0x38] sm:$0xff]
        %v428 = vld [vmem:[%s3 + $0x40] sm:$0xff]
        %v429 = vld [vmem:[%s3 + $0x48] sm:$0xff]
        %v430 = vld [vmem:[%s3 + $0x50] sm:$0xff]
        %v431 = vld [vmem:[%s3 + $0x58] sm:$0xff]
        %v432 = vld [vmem:[%s3 + $0x60] sm:$0xff]
        %v433 = vld [vmem:[%s3 + $0x68] sm:$0xff]
        %v434 = vld [vmem:[%s3 + $0x70] sm:$0xff]
        %v435 = vld [vmem:[%s3 + $0x78] sm:$0xff]
        %v436 = vld [vmem:[%s3 + $0x80] sm:$0xff]
        %v437 = vld [vmem:[%s3 + $0x88] sm:$0xff]
        %v438 = vld [vmem:[%s3 + $0x90] sm:$0xff]
        %v439 = vld [vmem:[%s3 + $0x98] sm:$0xff]
        %v440 = vld [vmem:[%s3 + $0xa0] sm:$0xff]
        %v441 = vld [vmem:[%s3 + $0xa8] sm:$0xff]
        %v442 = vld [vmem:[%s3 + $0xb0] sm:$0xff]
        %v443 = vld [vmem:[%s3 + $0xb8] sm:$0xff]
        %v444 = vld [vmem:[%s3 + $0xc0] sm:$0xff]
        %v445 = vld [vmem:[%s3 + $0xc8] sm:$0xff]
        %v446 = vld [vmem:[%s3 + $0xd0] sm:$0xff]
        %v447 = vld [vmem:[%s3 + $0xd8] sm:$0xff]
        %v448 = vld [vmem:[%s3 + $0xe0] sm:$0xff]
        %v449 = vld [vmem:[%s3 + $0xe8] sm:$0xff]
        %v450 = vld [vmem:[%s3 + $0xf0] sm:$0xff]
        %v451 = vld [vmem:[%s3 + $0xf8] sm:$0xff]
        %v452 = vld [vmem:[%s3 + $0x100] sm:$0xff]
        %v453 = vld [vmem:[%s3 + $0x108] sm:$0xff]
        %v454 = vld [vmem:[%s3 + $0x110] sm:$0xff]
        %v455 = vld [vmem:[%s3 + $0x118] sm:$0xff]
        %v456 = vld [vmem:[%s3 + $0x120] sm:$0xff]
        %v457 = vld [vmem:[%s3 + $0x128] sm:$0xff]
        %v458 = vld [vmem:[%s3 + $0x130] sm:$0xff]
        %v459 = vld [vmem:[%s3 + $0x138] sm:$0xff]
        %v460 = vld [vmem:[%s3 + $0x140] sm:$0xff]
        %v461 = vld [vmem:[%s3 + $0x148] sm:$0xff]
        %v462 = vld [vmem:[%s3 + $0x150] sm:$0xff]
        %v463 = vld [vmem:[%s3 + $0x158] sm:$0xff]
        %v464 = vld [vmem:[%s3 + $0x160] sm:$0xff]
        %v465 = vld [vmem:[%s3 + $0x168] sm:$0xff]
        %v466 = vld [vmem:[%s3 + $0x170] sm:$0xff]
        %v467 = vld [vmem:[%s3 + $0x178] sm:$0xff]
        %v468 = vld [vmem:[%s3 + $0x180] sm:$0xff]
        %v469 = vld [vmem:[%s3 + $0x188] sm:$0xff]
        %v470 = vld [vmem:[%s3 + $0x190] sm:$0xff]
        %v471 = vld [vmem:[%s3 + $0x198] sm:$0xff]
        %v472 = vld [vmem:[%s3 + $0x1a0] sm:$0xff]
        %v473 = vld [vmem:[%s3 + $0x1a8] sm:$0xff]
        %v474 = vld [vmem:[%s3 + $0x1b0] sm:$0xff]
        %v475 = vld [vmem:[%s3 + $0x1b8] sm:$0xff]
        %v476 = vld [vmem:[%s3 + $0x1c0] sm:$0xff]
        %v477 = vld [vmem:[%s3 + $0x1c8] sm:$0xff]
        %v478 = vld [vmem:[%s3 + $0x1d0] sm:$0xff]
        %v479 = vld [vmem:[%s3 + $0x1d8] sm:$0xff]
        %v480 = vld [vmem:[%s3 + $0x1e0] sm:$0xff]
        %v481 = vld [vmem:[%s3 + $0x1e8] sm:$0xff]
        %v482 = vld [vmem:[%s3 + $0x1f0] sm:$0xff]
        %v483 = vld [vmem:[%s3 + $0x1f8] sm:$0xff]
        %v484 = vld [vmem:[%s3 + $0x200] sm:$0xff]
        %v485 = vld [vmem:[%s3 + $0x208] sm:$0xff]
        %v486 = vld [vmem:[%s3 + $0x210] sm:$0xff]
        %v487 = vld [vmem:[%s3 + $0x218] sm:$0xff]
        %v488 = vld [vmem:[%s3 + $0x220] sm:$0xff]
        %v489 = vld [vmem:[%s3 + $0x228] sm:$0xff]
        %v490 = vld [vmem:[%s3 + $0x230] sm:$0xff]
        %v491 = vld [vmem:[%s3 + $0x238] sm:$0xff]
        %v492 = vld [vmem:[%s3 + $0x240] sm:$0xff]
        %v493 = vld [vmem:[%s3 + $0x248] sm:$0xff]
        %v494 = vld [vmem:[%s3 + $0x250] sm:$0xff]
        %v495 = vld [vmem:[%s3 + $0x258] sm:$0xff]
        %v496 = vld [vmem:[%s3 + $0x260] sm:$0xff]
        %v497 = vld [vmem:[%s3 + $0x268] sm:$0xff]
        %v498 = vld [vmem:[%s3 + $0x270] sm:$0xff]
        %v499 = vld [vmem:[%s3 + $0x278] sm:$0xff]
        %v500 = vld [vmem:[%s3 + $0x280] sm:$0xff]
        %v501 = vld [vmem:[%s3 + $0x288] sm:$0xff]
        %v502 = vld [vmem:[%s3 + $0x290] sm:$0xff]
        %v503 = vld [vmem:[%s3 + $0x298] sm:$0xff]
        %v504 = vld [vmem:[%s3 + $0x2a0] sm:$0xff]
        %v505 = vld [vmem:[%s3 + $0x2a8] sm:$0xff]
        %v506 = vld [vmem:[%s3 + $0x2b0] sm:$0xff]
        %v507 = vld [vmem:[%s3 + $0x2b8] sm:$0xff]
        %v508 = vld [vmem:[%s3 + $0x2c0] sm:$0xff]
        %v509 = vld [vmem:[%s3 + $0x2c8] sm:$0xff]
        %v510 = vld [vmem:[%s3 + $0x2d0] sm:$0xff]
        %v511 = vld [vmem:[%s3 + $0x2d8] sm:$0xff]
        %v512 = vld [vmem:[%s3 + $0x2e0] sm:$0xff]
        %v513 = vld [vmem:[%s3 + $0x2e8] sm:$0xff]
        %v514 = vld [vmem:[%s3 + $0x2f0] sm:$0xff]
        %v515 = vld [vmem:[%s3 + $0x2f8] sm:$0xff]
        %v516 = vld [vmem:[%s3 + $0x300] sm:$0xff]
        %v517 = vld [vmem:[%s3 + $0x308] sm:$0xff]
        %v518 = vld [vmem:[%s3 + $0x310] sm:$0xff]
        %v519 = vld [vmem:[%s3 + $0x318] sm:$0xff]
        %v520 = vld [vmem:[%s3 + $0x320] sm:$0xff]
        %v521 = vld [vmem:[%s3 + $0x328] sm:$0xff]
        %v522 = vld [vmem:[%s3 + $0x330] sm:$0xff]
        %v523 = vld [vmem:[%s3 + $0x338] sm:$0xff]
        %v524 = vld [vmem:[%s3 + $0x340] sm:$0xff]
        %v525 = vld [vmem:[%s3 + $0x348] sm:$0xff]
        %v526 = vld [vmem:[%s3 + $0x350] sm:$0xff]
        %v527 = vld [vmem:[%s3 + $0x358] sm:$0xff]
        %v528 = vld [vmem:[%s3 + $0x360] sm:$0xff]
        %v529 = vld [vmem:[%s3 + $0x368] sm:$0xff]
        %v530 = vld [vmem:[%s3 + $0x370] sm:$0xff]
        %v531 = vld [vmem:[%s3 + $0x378] sm:$0xff]
        %v532 = vld [vmem:[%s3 + $0x380] sm:$0xff]
        %v533 = vld [vmem:[%s3 + $0x388] sm:$0xff]
        %v534 = vld [vmem:[%s3 + $0x390] sm:$0xff]
        %v535 = vld [vmem:[%s3 + $0x398] sm:$0xff]
        %v536 = vld [vmem:[%s3 + $0x3a0] sm:$0xff]
        %v537 = vld [vmem:[%s3 + $0x3a8] sm:$0xff]
        %v538 = vld [vmem:[%s3 + $0x3b0] sm:$0xff]
        %v539 = vld [vmem:[%s3 + $0x3b8] sm:$0xff]
        %v540 = vld [vmem:[%s3 + $0x3c0] sm:$0xff]
        %v541 = vld [vmem:[%s3 + $0x3c8] sm:$0xff]
        %v542 = vld [vmem:[%s3 + $0x3d0] sm:$0xff]
        %v543 = vld [vmem:[%s3 + $0x3d8] sm:$0xff]
        %v544 = vld [vmem:[%s3 + $0x3e0] sm:$0xff]
        %v545 = vld [vmem:[%s3 + $0x3e8] sm:$0xff]
        %v546 = vld [vmem:[%s3 + $0x3f0] sm:$0xff]
        %v547 = vld [vmem:[%s3 + $0x3f8] sm:$0xff]
        %v548 = vld [vmem:[%s3 + $0x400] sm:$0xff]
        %v549 = vld [vmem:[%s3 + $0x408] sm:$0xff]
        %v550 = vld [vmem:[%s3 + $0x410] sm:$0xff]
        %v551 = vld [vmem:[%s3 + $0x418] sm:$0xff]
        %v552 = vld [vmem:[%s3 + $0x420] sm:$0xff]
        %v553 = vld [vmem:[%s3 + $0x428] sm:$0xff]
        %v554 = vld [vmem:[%s3 + $0x430] sm:$0xff]
        %v555 = vld [vmem:[%s3 + $0x438] sm:$0xff]
        %v556 = vld [vmem:[%s3 + $0x440] sm:$0xff]
        %v557 = vld [vmem:[%s3 + $0x448] sm:$0xff]
        %v558 = vld [vmem:[%s3 + $0x450] sm:$0xff]
        %v559 = vld [vmem:[%s3 + $0x458] sm:$0xff]
        %v560 = vld [vmem:[%s3 + $0x460] sm:$0xff]
        %v561 = vld [vmem:[%s3 + $0x468] sm:$0xff]
        %v562 = vld [vmem:[%s3 + $0x470] sm:$0xff]
        %v563 = vld [vmem:[%s3 + $0x478] sm:$0xff]
        %v564 = vld [vmem:[%s3 + $0x480] sm:$0xff]
        %v565 = vld [vmem:[%s3 + $0x488] sm:$0xff]
        %v566 = vld [vmem:[%s3 + $0x490] sm:$0xff]
        %v567 = vld [vmem:[%s3 + $0x498] sm:$0xff]
        %v568 = vld [vmem:[%s3 + $0x4a0] sm:$0xff]
        %v569 = vld [vmem:[%s3 + $0x4a8] sm:$0xff]
        %v570 = vld [vmem:[%s3 + $0x4b0] sm:$0xff]
        %v571 = vld [vmem:[%s3 + $0x4b8] sm:$0xff]
        %v572 = vld [vmem:[%s3 + $0x4c0] sm:$0xff]
        %v573 = vld [vmem:[%s3 + $0x4c8] sm:$0xff]
        %v574 = vld [vmem:[%s3 + $0x4d0] sm:$0xff]
        %v575 = vld [vmem:[%s3 + $0x4d8] sm:$0xff]
        %v576 = vld [vmem:[%s3 + $0x4e0] sm:$0xff]
        %v577 = vld [vmem:[%s3 + $0x4e8] sm:$0xff]
        %v578 = vld [vmem:[%s3 + $0x4f0] sm:$0xff]
        %v579 = vld [vmem:[%s3 + $0x4f8] sm:$0xff]
        %v580 = vld [vmem:[%s3 + $0x500] sm:$0xff]
        %v581 = vld [vmem:[%s3 + $0x508] sm:$0xff]
        %v582 = vld [vmem:[%s3 + $0x510] sm:$0xff]
        %v583 = vld [vmem:[%s3 + $0x518] sm:$0xff]
        %v584 = vld [vmem:[%s3 + $0x520] sm:$0xff]
        %v585 = vld [vmem:[%s3 + $0x528] sm:$0xff]
        %v586 = vld [vmem:[%s3 + $0x530] sm:$0xff]
        %v587 = vld [vmem:[%s3 + $0x538] sm:$0xff]
        %v588 = vld [vmem:[%s3 + $0x540] sm:$0xff]
        %v589 = vld [vmem:[%s3 + $0x548] sm:$0xff]
        %v590 = vld [vmem:[%s3 + $0x550] sm:$0xff]
        %v591 = vld [vmem:[%s3 + $0x558] sm:$0xff]
        %v592 = vld [vmem:[%s3 + $0x560] sm:$0xff]
        %v593 = vld [vmem:[%s3 + $0x568] sm:$0xff]
        %v594 = vld [vmem:[%s3 + $0x570] sm:$0xff]
        %v595 = vld [vmem:[%s3 + $0x578] sm:$0xff]
        %v596 = vld [vmem:[%s3 + $0x580] sm:$0xff]
        %v597 = vld [vmem:[%s3 + $0x588] sm:$0xff]
        %v598 = vld [vmem:[%s3 + $0x590] sm:$0xff]
        %v599 = vld [vmem:[%s3 + $0x598] sm:$0xff]
        %v600 = vld [vmem:[%s3 + $0x5a0] sm:$0xff]
        %v601 = vld [vmem:[%s3 + $0x5a8] sm:$0xff]
        %v602 = vld [vmem:[%s3 + $0x5b0] sm:$0xff]
        %v603 = vld [vmem:[%s3 + $0x5b8] sm:$0xff]
        %v604 = vld [vmem:[%s3 + $0x5c0] sm:$0xff]
        %v605 = vld [vmem:[%s3 + $0x5c8] sm:$0xff]
        %v606 = vld [vmem:[%s3 + $0x5d0] sm:$0xff]
        %v607 = vld [vmem:[%s3 + $0x5d8] sm:$0xff]
        %v608 = vld [vmem:[%s3 + $0x5e0] sm:$0xff]
        %v609 = vld [vmem:[%s3 + $0x5e8] sm:$0xff]
        %v610 = vld [vmem:[%s3 + $0x5f0] sm:$0xff]
        %v611 = vld [vmem:[%s3 + $0x5f8] sm:$0xff]
        %v612 = vld [vmem:[%s4] sm:$0x3f]
        %v614 = vlaneseq
        %v615 = vshrl.u32 %v614, 7
        %v616 = vsub.s32 0, %v615
        %v617 = vrot.slane %v612, %v616
        %v618 = vlaneseq
        %v619 = vshrl.u32 %v618, 7
        %v620 = vsub.s32 1, %v619
        %v621 = vrot.slane %v612, %v620
        %v622 = vlaneseq
        %v623 = vshrl.u32 %v622, 7
        %v624 = vsub.s32 2, %v623
        %v625 = vrot.slane %v612, %v624
        %v626 = vlaneseq
        %v627 = vshrl.u32 %v626, 7
        %v628 = vsub.s32 3, %v627
        %v629 = vrot.slane %v612, %v628
        %v630 = vlaneseq
        %v631 = vshrl.u32 %v630, 7
        %v632 = vsub.s32 4, %v631
        %v633 = vrot.slane %v612, %v632
        %v634 = vlaneseq
        %v635 = vshrl.u32 %v634, 7
        %v636 = vsub.s32 5, %v635
        %v637 = vrot.slane %v612, %v636
        %v836 = vunpack.c.l.b16 %v420
        %v837 = vunpack.c.h.b16 %v420
        %v838 = vunpack.c.l.b16 %v421
        %v839 = vunpack.c.h.b16 %v421
        %v840 = vunpack.c.l.b16 %v422
        %v841 = vunpack.c.h.b16 %v422
        %v842 = vunpack.c.l.b16 %v423
        %v843 = vunpack.c.h.b16 %v423
        %v844 = vunpack.c.l.b16 %v424
        %v845 = vunpack.c.h.b16 %v424
        %v846 = vunpack.c.l.b16 %v425
        %v847 = vunpack.c.h.b16 %v425
        %v848 = vunpack.c.l.b16 %v426
        %v849 = vunpack.c.h.b16 %v426
        %v850 = vunpack.c.l.b16 %v427
        %v851 = vunpack.c.h.b16 %v427
        %v852 = vunpack.c.l.b16 %v428
        %v853 = vunpack.c.h.b16 %v428
        %v854 = vunpack.c.l.b16 %v429
        %v855 = vunpack.c.h.b16 %v429
        %v856 = vunpack.c.l.b16 %v430
        %v857 = vunpack.c.h.b16 %v430
        %v858 = vunpack.c.l.b16 %v431
        %v859 = vunpack.c.h.b16 %v431
        %v860 = vunpack.c.l.b16 %v432
        %v861 = vunpack.c.h.b16 %v432
        %v862 = vunpack.c.l.b16 %v433
        %v863 = vunpack.c.h.b16 %v433
        %v864 = vunpack.c.l.b16 %v434
        %v865 = vunpack.c.h.b16 %v434
        %v866 = vunpack.c.l.b16 %v435
        %v867 = vunpack.c.h.b16 %v435
        %v868 = vunpack.c.l.b16 %v436
        %v869 = vunpack.c.h.b16 %v436
        %v870 = vunpack.c.l.b16 %v437
        %v871 = vunpack.c.h.b16 %v437
        %v872 = vunpack.c.l.b16 %v438
        %v873 = vunpack.c.h.b16 %v438
        %v874 = vunpack.c.l.b16 %v439
        %v875 = vunpack.c.h.b16 %v439
        %v876 = vunpack.c.l.b16 %v440
        %v877 = vunpack.c.h.b16 %v440
        %v878 = vunpack.c.l.b16 %v441
        %v879 = vunpack.c.h.b16 %v441
        %v880 = vunpack.c.l.b16 %v442
        %v881 = vunpack.c.h.b16 %v442
        %v882 = vunpack.c.l.b16 %v443
        %v883 = vunpack.c.h.b16 %v443
        %v884 = vunpack.c.l.b16 %v444
        %v885 = vunpack.c.h.b16 %v444
        %v886 = vunpack.c.l.b16 %v445
        %v887 = vunpack.c.h.b16 %v445
        %v888 = vunpack.c.l.b16 %v446
        %v889 = vunpack.c.h.b16 %v446
        %v890 = vunpack.c.l.b16 %v447
        %v891 = vunpack.c.h.b16 %v447
        %v892 = vunpack.c.l.b16 %v448
        %v893 = vunpack.c.h.b16 %v448
        %v894 = vunpack.c.l.b16 %v449
        %v895 = vunpack.c.h.b16 %v449
        %v896 = vunpack.c.l.b16 %v450
        %v897 = vunpack.c.h.b16 %v450
        %v898 = vunpack.c.l.b16 %v451
        %v899 = vunpack.c.h.b16 %v451
        %v900 = vunpack.c.l.b16 %v452
        %v901 = vunpack.c.h.b16 %v452
        %v902 = vunpack.c.l.b16 %v453
        %v903 = vunpack.c.h.b16 %v453
        %v904 = vunpack.c.l.b16 %v454
        %v905 = vunpack.c.h.b16 %v454
        %v906 = vunpack.c.l.b16 %v455
        %v907 = vunpack.c.h.b16 %v455
        %v908 = vunpack.c.l.b16 %v456
        %v909 = vunpack.c.h.b16 %v456
        %v910 = vunpack.c.l.b16 %v457
        %v911 = vunpack.c.h.b16 %v457
        %v912 = vunpack.c.l.b16 %v458
        %v913 = vunpack.c.h.b16 %v458
        %v914 = vunpack.c.l.b16 %v459
        %v915 = vunpack.c.h.b16 %v459
        %v916 = vunpack.c.l.b16 %v460
        %v917 = vunpack.c.h.b16 %v460
        %v918 = vunpack.c.l.b16 %v461
        %v919 = vunpack.c.h.b16 %v461
        %v920 = vunpack.c.l.b16 %v462
        %v921 = vunpack.c.h.b16 %v462
        %v922 = vunpack.c.l.b16 %v463
        %v923 = vunpack.c.h.b16 %v463
        %v924 = vunpack.c.l.b16 %v464
        %v925 = vunpack.c.h.b16 %v464
        %v926 = vunpack.c.l.b16 %v465
        %v927 = vunpack.c.h.b16 %v465
        %v928 = vunpack.c.l.b16 %v466
        %v929 = vunpack.c.h.b16 %v466
        %v930 = vunpack.c.l.b16 %v467
        %v931 = vunpack.c.h.b16 %v467
        %v932 = vunpack.c.l.b16 %v468
        %v933 = vunpack.c.h.b16 %v468
        %v934 = vunpack.c.l.b16 %v469
        %v935 = vunpack.c.h.b16 %v469
        %v936 = vunpack.c.l.b16 %v470
        %v937 = vunpack.c.h.b16 %v470
        %v938 = vunpack.c.l.b16 %v471
        %v939 = vunpack.c.h.b16 %v471
        %v940 = vunpack.c.l.b16 %v472
        %v941 = vunpack.c.h.b16 %v472
        %v942 = vunpack.c.l.b16 %v473
        %v943 = vunpack.c.h.b16 %v473
        %v944 = vunpack.c.l.b16 %v474
        %v945 = vunpack.c.h.b16 %v474
        %v946 = vunpack.c.l.b16 %v475
        %v947 = vunpack.c.h.b16 %v475
        %v948 = vunpack.c.l.b16 %v476
        %v949 = vunpack.c.h.b16 %v476
        %v950 = vunpack.c.l.b16 %v477
        %v951 = vunpack.c.h.b16 %v477
        %v952 = vunpack.c.l.b16 %v478
        %v953 = vunpack.c.h.b16 %v478
        %v954 = vunpack.c.l.b16 %v479
        %v955 = vunpack.c.h.b16 %v479
        %v956 = vunpack.c.l.b16 %v480
        %v957 = vunpack.c.h.b16 %v480
        %v958 = vunpack.c.l.b16 %v481
        %v959 = vunpack.c.h.b16 %v481
        %v960 = vunpack.c.l.b16 %v482
        %v961 = vunpack.c.h.b16 %v482
        %v962 = vunpack.c.l.b16 %v483
        %v963 = vunpack.c.h.b16 %v483
        %v964 = vunpack.c.l.b16 %v484
        %v965 = vunpack.c.h.b16 %v484
        %v966 = vunpack.c.l.b16 %v485
        %v967 = vunpack.c.h.b16 %v485
        %v968 = vunpack.c.l.b16 %v486
        %v969 = vunpack.c.h.b16 %v486
        %v970 = vunpack.c.l.b16 %v487
        %v971 = vunpack.c.h.b16 %v487
        %v972 = vunpack.c.l.b16 %v488
        %v973 = vunpack.c.h.b16 %v488
        %v974 = vunpack.c.l.b16 %v489
        %v975 = vunpack.c.h.b16 %v489
        %v976 = vunpack.c.l.b16 %v490
        %v977 = vunpack.c.h.b16 %v490
        %v978 = vunpack.c.l.b16 %v491
        %v979 = vunpack.c.h.b16 %v491
        %v980 = vunpack.c.l.b16 %v492
        %v981 = vunpack.c.h.b16 %v492
        %v982 = vunpack.c.l.b16 %v493
        %v983 = vunpack.c.h.b16 %v493
        %v984 = vunpack.c.l.b16 %v494
        %v985 = vunpack.c.h.b16 %v494
        %v986 = vunpack.c.l.b16 %v495
        %v987 = vunpack.c.h.b16 %v495
        %v988 = vunpack.c.l.b16 %v496
        %v989 = vunpack.c.h.b16 %v496
        %v990 = vunpack.c.l.b16 %v497
        %v991 = vunpack.c.h.b16 %v497
        %v992 = vunpack.c.l.b16 %v498
        %v993 = vunpack.c.h.b16 %v498
        %v994 = vunpack.c.l.b16 %v499
        %v995 = vunpack.c.h.b16 %v499
        %v996 = vunpack.c.l.b16 %v500
        %v997 = vunpack.c.h.b16 %v500
        %v998 = vunpack.c.l.b16 %v501
        %v999 = vunpack.c.h.b16 %v501
        %v1000 = vunpack.c.l.b16 %v502
        %v1001 = vunpack.c.h.b16 %v502
        %v1002 = vunpack.c.l.b16 %v503
        %v1003 = vunpack.c.h.b16 %v503
        %v1004 = vunpack.c.l.b16 %v504
        %v1005 = vunpack.c.h.b16 %v504
        %v1006 = vunpack.c.l.b16 %v505
        %v1007 = vunpack.c.h.b16 %v505
        %v1008 = vunpack.c.l.b16 %v506
        %v1009 = vunpack.c.h.b16 %v506
        %v1010 = vunpack.c.l.b16 %v507
        %v1011 = vunpack.c.h.b16 %v507
        %v1012 = vunpack.c.l.b16 %v508
        %v1013 = vunpack.c.h.b16 %v508
        %v1014 = vunpack.c.l.b16 %v509
        %v1015 = vunpack.c.h.b16 %v509
        %v1016 = vunpack.c.l.b16 %v510
        %v1017 = vunpack.c.h.b16 %v510
        %v1018 = vunpack.c.l.b16 %v511
        %v1019 = vunpack.c.h.b16 %v511
        %v1020 = vunpack.c.l.b16 %v512
        %v1021 = vunpack.c.h.b16 %v512
        %v1022 = vunpack.c.l.b16 %v513
        %v1023 = vunpack.c.h.b16 %v513
        %v1024 = vunpack.c.l.b16 %v514
        %v1025 = vunpack.c.h.b16 %v514
        %v1026 = vunpack.c.l.b16 %v515
        %v1027 = vunpack.c.h.b16 %v515
        %v1028 = vunpack.c.l.b16 %v516
        %v1029 = vunpack.c.h.b16 %v516
        %v1030 = vunpack.c.l.b16 %v517
        %v1031 = vunpack.c.h.b16 %v517
        %v1032 = vunpack.c.l.b16 %v518
        %v1033 = vunpack.c.h.b16 %v518
        %v1034 = vunpack.c.l.b16 %v519
        %v1035 = vunpack.c.h.b16 %v519
        %v1036 = vunpack.c.l.b16 %v520
        %v1037 = vunpack.c.h.b16 %v520
        %v1038 = vunpack.c.l.b16 %v521
        %v1039 = vunpack.c.h.b16 %v521
        %v1040 = vunpack.c.l.b16 %v522
        %v1041 = vunpack.c.h.b16 %v522
        %v1042 = vunpack.c.l.b16 %v523
        %v1043 = vunpack.c.h.b16 %v523
        %v1044 = vunpack.c.l.b16 %v524
        %v1045 = vunpack.c.h.b16 %v524
        %v1046 = vunpack.c.l.b16 %v525
        %v1047 = vunpack.c.h.b16 %v525
        %v1048 = vunpack.c.l.b16 %v526
        %v1049 = vunpack.c.h.b16 %v526
        %v1050 = vunpack.c.l.b16 %v527
        %v1051 = vunpack.c.h.b16 %v527
        %v1052 = vunpack.c.l.b16 %v528
        %v1053 = vunpack.c.h.b16 %v528
        %v1054 = vunpack.c.l.b16 %v529
        %v1055 = vunpack.c.h.b16 %v529
        %v1056 = vunpack.c.l.b16 %v530
        %v1057 = vunpack.c.h.b16 %v530
        %v1058 = vunpack.c.l.b16 %v531
        %v1059 = vunpack.c.h.b16 %v531
        %v1060 = vunpack.c.l.b16 %v532
        %v1061 = vunpack.c.h.b16 %v532
        %v1062 = vunpack.c.l.b16 %v533
        %v1063 = vunpack.c.h.b16 %v533
        %v1064 = vunpack.c.l.b16 %v534
        %v1065 = vunpack.c.h.b16 %v534
        %v1066 = vunpack.c.l.b16 %v535
        %v1067 = vunpack.c.h.b16 %v535
        %v1068 = vunpack.c.l.b16 %v536
        %v1069 = vunpack.c.h.b16 %v536
        %v1070 = vunpack.c.l.b16 %v537
        %v1071 = vunpack.c.h.b16 %v537
        %v1072 = vunpack.c.l.b16 %v538
        %v1073 = vunpack.c.h.b16 %v538
        %v1074 = vunpack.c.l.b16 %v539
        %v1075 = vunpack.c.h.b16 %v539
        %v1076 = vunpack.c.l.b16 %v540
        %v1077 = vunpack.c.h.b16 %v540
        %v1078 = vunpack.c.l.b16 %v541
        %v1079 = vunpack.c.h.b16 %v541
        %v1080 = vunpack.c.l.b16 %v542
        %v1081 = vunpack.c.h.b16 %v542
        %v1082 = vunpack.c.l.b16 %v543
        %v1083 = vunpack.c.h.b16 %v543
        %v1084 = vunpack.c.l.b16 %v544
        %v1085 = vunpack.c.h.b16 %v544
        %v1086 = vunpack.c.l.b16 %v545
        %v1087 = vunpack.c.h.b16 %v545
        %v1088 = vunpack.c.l.b16 %v546
        %v1089 = vunpack.c.h.b16 %v546
        %v1090 = vunpack.c.l.b16 %v547
        %v1091 = vunpack.c.h.b16 %v547
        %v1092 = vunpack.c.l.b16 %v548
        %v1093 = vunpack.c.h.b16 %v548
        %v1094 = vunpack.c.l.b16 %v549
        %v1095 = vunpack.c.h.b16 %v549
        %v1096 = vunpack.c.l.b16 %v550
        %v1097 = vunpack.c.h.b16 %v550
        %v1098 = vunpack.c.l.b16 %v551
        %v1099 = vunpack.c.h.b16 %v551
        %v1100 = vunpack.c.l.b16 %v552
        %v1101 = vunpack.c.h.b16 %v552
        %v1102 = vunpack.c.l.b16 %v553
        %v1103 = vunpack.c.h.b16 %v553
        %v1104 = vunpack.c.l.b16 %v554
        %v1105 = vunpack.c.h.b16 %v554
        %v1106 = vunpack.c.l.b16 %v555
        %v1107 = vunpack.c.h.b16 %v555
        %v1108 = vunpack.c.l.b16 %v556
        %v1109 = vunpack.c.h.b16 %v556
        %v1110 = vunpack.c.l.b16 %v557
        %v1111 = vunpack.c.h.b16 %v557
        %v1112 = vunpack.c.l.b16 %v558
        %v1113 = vunpack.c.h.b16 %v558
        %v1114 = vunpack.c.l.b16 %v559
        %v1115 = vunpack.c.h.b16 %v559
        %v1116 = vunpack.c.l.b16 %v560
        %v1117 = vunpack.c.h.b16 %v560
        %v1118 = vunpack.c.l.b16 %v561
        %v1119 = vunpack.c.h.b16 %v561
        %v1120 = vunpack.c.l.b16 %v562
        %v1121 = vunpack.c.h.b16 %v562
        %v1122 = vunpack.c.l.b16 %v563
        %v1123 = vunpack.c.h.b16 %v563
        %v1124 = vunpack.c.l.b16 %v564
        %v1125 = vunpack.c.h.b16 %v564
        %v1126 = vunpack.c.l.b16 %v565
        %v1127 = vunpack.c.h.b16 %v565
        %v1128 = vunpack.c.l.b16 %v566
        %v1129 = vunpack.c.h.b16 %v566
        %v1130 = vunpack.c.l.b16 %v567
        %v1131 = vunpack.c.h.b16 %v567
        %v1132 = vunpack.c.l.b16 %v568
        %v1133 = vunpack.c.h.b16 %v568
        %v1134 = vunpack.c.l.b16 %v569
        %v1135 = vunpack.c.h.b16 %v569
        %v1136 = vunpack.c.l.b16 %v570
        %v1137 = vunpack.c.h.b16 %v570
        %v1138 = vunpack.c.l.b16 %v571
        %v1139 = vunpack.c.h.b16 %v571
        %v1140 = vunpack.c.l.b16 %v572
        %v1141 = vunpack.c.h.b16 %v572
        %v1142 = vunpack.c.l.b16 %v573
        %v1143 = vunpack.c.h.b16 %v573
        %v1144 = vunpack.c.l.b16 %v574
        %v1145 = vunpack.c.h.b16 %v574
        %v1146 = vunpack.c.l.b16 %v575
        %v1147 = vunpack.c.h.b16 %v575
        %v1148 = vunpack.c.l.b16 %v576
        %v1149 = vunpack.c.h.b16 %v576
        %v1150 = vunpack.c.l.b16 %v577
        %v1151 = vunpack.c.h.b16 %v577
        %v1152 = vunpack.c.l.b16 %v578
        %v1153 = vunpack.c.h.b16 %v578
        %v1154 = vunpack.c.l.b16 %v579
        %v1155 = vunpack.c.h.b16 %v579
        %v1156 = vunpack.c.l.b16 %v580
        %v1157 = vunpack.c.h.b16 %v580
        %v1158 = vunpack.c.l.b16 %v581
        %v1159 = vunpack.c.h.b16 %v581
        %v1160 = vunpack.c.l.b16 %v582
        %v1161 = vunpack.c.h.b16 %v582
        %v1162 = vunpack.c.l.b16 %v583
        %v1163 = vunpack.c.h.b16 %v583
        %v1164 = vunpack.c.l.b16 %v584
        %v1165 = vunpack.c.h.b16 %v584
        %v1166 = vunpack.c.l.b16 %v585
        %v1167 = vunpack.c.h.b16 %v585
        %v1168 = vunpack.c.l.b16 %v586
        %v1169 = vunpack.c.h.b16 %v586
        %v1170 = vunpack.c.l.b16 %v587
        %v1171 = vunpack.c.h.b16 %v587
        %v1172 = vunpack.c.l.b16 %v588
        %v1173 = vunpack.c.h.b16 %v588
        %v1174 = vunpack.c.l.b16 %v589
        %v1175 = vunpack.c.h.b16 %v589
        %v1176 = vunpack.c.l.b16 %v590
        %v1177 = vunpack.c.h.b16 %v590
        %v1178 = vunpack.c.l.b16 %v591
        %v1179 = vunpack.c.h.b16 %v591
        %v1180 = vunpack.c.l.b16 %v592
        %v1181 = vunpack.c.h.b16 %v592
        %v1182 = vunpack.c.l.b16 %v593
        %v1183 = vunpack.c.h.b16 %v593
        %v1184 = vunpack.c.l.b16 %v594
        %v1185 = vunpack.c.h.b16 %v594
        %v1186 = vunpack.c.l.b16 %v595
        %v1187 = vunpack.c.h.b16 %v595
        %v1188 = vunpack.c.l.b16 %v596
        %v1189 = vunpack.c.h.b16 %v596
        %v1190 = vunpack.c.l.b16 %v597
        %v1191 = vunpack.c.h.b16 %v597
        %v1192 = vunpack.c.l.b16 %v598
        %v1193 = vunpack.c.h.b16 %v598
        %v1194 = vunpack.c.l.b16 %v599
        %v1195 = vunpack.c.h.b16 %v599
        %v1196 = vunpack.c.l.b16 %v600
        %v1197 = vunpack.c.h.b16 %v600
        %v1198 = vunpack.c.l.b16 %v601
        %v1199 = vunpack.c.h.b16 %v601
        %v1200 = vunpack.c.l.b16 %v602
        %v1201 = vunpack.c.h.b16 %v602
        %v1202 = vunpack.c.l.b16 %v603
        %v1203 = vunpack.c.h.b16 %v603
        %v1204 = vunpack.c.l.b16 %v604
        %v1205 = vunpack.c.h.b16 %v604
        %v1206 = vunpack.c.l.b16 %v605
        %v1207 = vunpack.c.h.b16 %v605
        %v1208 = vunpack.c.l.b16 %v606
        %v1209 = vunpack.c.h.b16 %v606
        %v1210 = vunpack.c.l.b16 %v607
        %v1211 = vunpack.c.h.b16 %v607
        %v1212 = vunpack.c.l.b16 %v608
        %v1213 = vunpack.c.h.b16 %v608
        %v1214 = vunpack.c.l.b16 %v609
        %v1215 = vunpack.c.h.b16 %v609
        %v1216 = vunpack.c.l.b16 %v610
        %v1217 = vunpack.c.h.b16 %v610
        %v1218 = vunpack.c.l.b16 %v611
        %v1219 = vunpack.c.h.b16 %v611
        %v1220 = vpack.c.b16 %v842, %v836
        %v1221 = vpack.c.b16 %v843, %v837
        %v1222 = vpack.c.b16 %v844, %v838
        %v1223 = vpack.c.b16 %v845, %v839
        %v1224 = vpack.c.b16 %v846, %v840
        %v1225 = vpack.c.b16 %v847, %v841
        %v1226 = vpack.c.b16 %v854, %v848
        %v1227 = vpack.c.b16 %v855, %v849
        %v1228 = vpack.c.b16 %v856, %v850
        %v1229 = vpack.c.b16 %v857, %v851
        %v1230 = vpack.c.b16 %v858, %v852
        %v1231 = vpack.c.b16 %v859, %v853
        %v1232 = vpack.c.b16 %v866, %v860
        %v1233 = vpack.c.b16 %v867, %v861
        %v1234 = vpack.c.b16 %v868, %v862
        %v1235 = vpack.c.b16 %v869, %v863
        %v1236 = vpack.c.b16 %v870, %v864
        %v1237 = vpack.c.b16 %v871, %v865
        %v1238 = vpack.c.b16 %v878, %v872
        %v1239 = vpack.c.b16 %v879, %v873
        %v1240 = vpack.c.b16 %v880, %v874
        %v1241 = vpack.c.b16 %v881, %v875
        %v1242 = vpack.c.b16 %v882, %v876
        %v1243 = vpack.c.b16 %v883, %v877
        %v1244 = vpack.c.b16 %v890, %v884
        %v1245 = vpack.c.b16 %v891, %v885
        %v1246 = vpack.c.b16 %v892, %v886
        %v1247 = vpack.c.b16 %v893, %v887
        %v1248 = vpack.c.b16 %v894, %v888
        %v1249 = vpack.c.b16 %v895, %v889
        %v1250 = vpack.c.b16 %v902, %v896
        %v1251 = vpack.c.b16 %v903, %v897
        %v1252 = vpack.c.b16 %v904, %v898
        %v1253 = vpack.c.b16 %v905, %v899
        %v1254 = vpack.c.b16 %v906, %v900
        %v1255 = vpack.c.b16 %v907, %v901
        %v1256 = vpack.c.b16 %v914, %v908
        %v1257 = vpack.c.b16 %v915, %v909
        %v1258 = vpack.c.b16 %v916, %v910
        %v1259 = vpack.c.b16 %v917, %v911
        %v1260 = vpack.c.b16 %v918, %v912
        %v1261 = vpack.c.b16 %v919, %v913
        %v1262 = vpack.c.b16 %v926, %v920
        %v1263 = vpack.c.b16 %v927, %v921
        %v1264 = vpack.c.b16 %v928, %v922
        %v1265 = vpack.c.b16 %v929, %v923
        %v1266 = vpack.c.b16 %v930, %v924
        %v1267 = vpack.c.b16 %v931, %v925
        %v1268 = vpack.c.b16 %v938, %v932
        %v1269 = vpack.c.b16 %v939, %v933
        %v1270 = vpack.c.b16 %v940, %v934
        %v1271 = vpack.c.b16 %v941, %v935
        %v1272 = vpack.c.b16 %v942, %v936
        %v1273 = vpack.c.b16 %v943, %v937
        %v1274 = vpack.c.b16 %v950, %v944
        %v1275 = vpack.c.b16 %v951, %v945
        %v1276 = vpack.c.b16 %v952, %v946
        %v1277 = vpack.c.b16 %v953, %v947
        %v1278 = vpack.c.b16 %v954, %v948
        %v1279 = vpack.c.b16 %v955, %v949
        %v1280 = vpack.c.b16 %v962, %v956
        %v1281 = vpack.c.b16 %v963, %v957
        %v1282 = vpack.c.b16 %v964, %v958
        %v1283 = vpack.c.b16 %v965, %v959
        %v1284 = vpack.c.b16 %v966, %v960
        %v1285 = vpack.c.b16 %v967, %v961
        %v1286 = vpack.c.b16 %v974, %v968
        %v1287 = vpack.c.b16 %v975, %v969
        %v1288 = vpack.c.b16 %v976, %v970
        %v1289 = vpack.c.b16 %v977, %v971
        %v1290 = vpack.c.b16 %v978, %v972
        %v1291 = vpack.c.b16 %v979, %v973
        %v1292 = vpack.c.b16 %v986, %v980
        %v1293 = vpack.c.b16 %v987, %v981
        %v1294 = vpack.c.b16 %v988, %v982
        %v1295 = vpack.c.b16 %v989, %v983
        %v1296 = vpack.c.b16 %v990, %v984
        %v1297 = vpack.c.b16 %v991, %v985
        %v1298 = vpack.c.b16 %v998, %v992
        %v1299 = vpack.c.b16 %v999, %v993
        %v1300 = vpack.c.b16 %v1000, %v994
        %v1301 = vpack.c.b16 %v1001, %v995
        %v1302 = vpack.c.b16 %v1002, %v996
        %v1303 = vpack.c.b16 %v1003, %v997
        %v1304 = vpack.c.b16 %v1010, %v1004
        %v1305 = vpack.c.b16 %v1011, %v1005
        %v1306 = vpack.c.b16 %v1012, %v1006
        %v1307 = vpack.c.b16 %v1013, %v1007
        %v1308 = vpack.c.b16 %v1014, %v1008
        %v1309 = vpack.c.b16 %v1015, %v1009
        %v1310 = vpack.c.b16 %v1022, %v1016
        %v1311 = vpack.c.b16 %v1023, %v1017
        %v1312 = vpack.c.b16 %v1024, %v1018
        %v1313 = vpack.c.b16 %v1025, %v1019
        %v1314 = vpack.c.b16 %v1026, %v1020
        %v1315 = vpack.c.b16 %v1027, %v1021
        %v1316 = vpack.c.b16 %v1034, %v1028
        %v1317 = vpack.c.b16 %v1035, %v1029
        %v1318 = vpack.c.b16 %v1036, %v1030
        %v1319 = vpack.c.b16 %v1037, %v1031
        %v1320 = vpack.c.b16 %v1038, %v1032
        %v1321 = vpack.c.b16 %v1039, %v1033
        %v1322 = vpack.c.b16 %v1046, %v1040
        %v1323 = vpack.c.b16 %v1047, %v1041
        %v1324 = vpack.c.b16 %v1048, %v1042
        %v1325 = vpack.c.b16 %v1049, %v1043
        %v1326 = vpack.c.b16 %v1050, %v1044
        %v1327 = vpack.c.b16 %v1051, %v1045
        %v1328 = vpack.c.b16 %v1058, %v1052
        %v1329 = vpack.c.b16 %v1059, %v1053
        %v1330 = vpack.c.b16 %v1060, %v1054
        %v1331 = vpack.c.b16 %v1061, %v1055
        %v1332 = vpack.c.b16 %v1062, %v1056
        %v1333 = vpack.c.b16 %v1063, %v1057
        %v1334 = vpack.c.b16 %v1070, %v1064
        %v1335 = vpack.c.b16 %v1071, %v1065
        %v1336 = vpack.c.b16 %v1072, %v1066
        %v1337 = vpack.c.b16 %v1073, %v1067
        %v1338 = vpack.c.b16 %v1074, %v1068
        %v1339 = vpack.c.b16 %v1075, %v1069
        %v1340 = vpack.c.b16 %v1082, %v1076
        %v1341 = vpack.c.b16 %v1083, %v1077
        %v1342 = vpack.c.b16 %v1084, %v1078
        %v1343 = vpack.c.b16 %v1085, %v1079
        %v1344 = vpack.c.b16 %v1086, %v1080
        %v1345 = vpack.c.b16 %v1087, %v1081
        %v1346 = vpack.c.b16 %v1094, %v1088
        %v1347 = vpack.c.b16 %v1095, %v1089
        %v1348 = vpack.c.b16 %v1096, %v1090
        %v1349 = vpack.c.b16 %v1097, %v1091
        %v1350 = vpack.c.b16 %v1098, %v1092
        %v1351 = vpack.c.b16 %v1099, %v1093
        %v1352 = vpack.c.b16 %v1106, %v1100
        %v1353 = vpack.c.b16 %v1107, %v1101
        %v1354 = vpack.c.b16 %v1108, %v1102
        %v1355 = vpack.c.b16 %v1109, %v1103
        %v1356 = vpack.c.b16 %v1110, %v1104
        %v1357 = vpack.c.b16 %v1111, %v1105
        %v1358 = vpack.c.b16 %v1118, %v1112
        %v1359 = vpack.c.b16 %v1119, %v1113
        %v1360 = vpack.c.b16 %v1120, %v1114
        %v1361 = vpack.c.b16 %v1121, %v1115
        %v1362 = vpack.c.b16 %v1122, %v1116
        %v1363 = vpack.c.b16 %v1123, %v1117
        %v1364 = vpack.c.b16 %v1130, %v1124
        %v1365 = vpack.c.b16 %v1131, %v1125
        %v1366 = vpack.c.b16 %v1132, %v1126
        %v1367 = vpack.c.b16 %v1133, %v1127
        %v1368 = vpack.c.b16 %v1134, %v1128
        %v1369 = vpack.c.b16 %v1135, %v1129
        %v1370 = vpack.c.b16 %v1142, %v1136
        %v1371 = vpack.c.b16 %v1143, %v1137
        %v1372 = vpack.c.b16 %v1144, %v1138
        %v1373 = vpack.c.b16 %v1145, %v1139
        %v1374 = vpack.c.b16 %v1146, %v1140
        %v1375 = vpack.c.b16 %v1147, %v1141
        %v1376 = vpack.c.b16 %v1154, %v1148
        %v1377 = vpack.c.b16 %v1155, %v1149
        %v1378 = vpack.c.b16 %v1156, %v1150
        %v1379 = vpack.c.b16 %v1157, %v1151
        %v1380 = vpack.c.b16 %v1158, %v1152
        %v1381 = vpack.c.b16 %v1159, %v1153
        %v1382 = vpack.c.b16 %v1166, %v1160
        %v1383 = vpack.c.b16 %v1167, %v1161
        %v1384 = vpack.c.b16 %v1168, %v1162
        %v1385 = vpack.c.b16 %v1169, %v1163
        %v1386 = vpack.c.b16 %v1170, %v1164
        %v1387 = vpack.c.b16 %v1171, %v1165
        %v1388 = vpack.c.b16 %v1178, %v1172
        %v1389 = vpack.c.b16 %v1179, %v1173
        %v1390 = vpack.c.b16 %v1180, %v1174
        %v1391 = vpack.c.b16 %v1181, %v1175
        %v1392 = vpack.c.b16 %v1182, %v1176
        %v1393 = vpack.c.b16 %v1183, %v1177
        %v1394 = vpack.c.b16 %v1190, %v1184
        %v1395 = vpack.c.b16 %v1191, %v1185
        %v1396 = vpack.c.b16 %v1192, %v1186
        %v1397 = vpack.c.b16 %v1193, %v1187
        %v1398 = vpack.c.b16 %v1194, %v1188
        %v1399 = vpack.c.b16 %v1195, %v1189
        %v1400 = vpack.c.b16 %v1202, %v1196
        %v1401 = vpack.c.b16 %v1203, %v1197
        %v1402 = vpack.c.b16 %v1204, %v1198
        %v1403 = vpack.c.b16 %v1205, %v1199
        %v1404 = vpack.c.b16 %v1206, %v1200
        %v1405 = vpack.c.b16 %v1207, %v1201
        %v1406 = vpack.c.b16 %v1214, %v1208
        %v1407 = vpack.c.b16 %v1215, %v1209
        %v1408 = vpack.c.b16 %v1216, %v1210
        %v1409 = vpack.c.b16 %v1217, %v1211
        %v1410 = vpack.c.b16 %v1218, %v1212
        %v1411 = vpack.c.b16 %v1219, %v1213
        %1604 = vmatprep.subr.bf16.mxu0 %v1221
        %1605 = vmatpush1.bf16.msra.mxu0 %v1220
        %1606 = vmatprep.subr.bf16.mxu0 %v1227
        %1607 = vmatpush1.bf16.msra.mxu0 %v1226
        %1608 = vmatprep.subr.bf16.mxu0 %v1233
        %1609 = vmatpush1.bf16.msra.mxu0 %v1232
        %1610 = vmatprep.subr.bf16.mxu0 %v1239
        %1611 = vmatpush1.bf16.msra.mxu0 %v1238
        %1612 = vmatprep.subr.bf16.mxu0 %v1245
        %1613 = vmatpush1.bf16.msra.mxu0 %v1244
        %1614 = vmatprep.subr.bf16.mxu0 %v1251
        %1615 = vmatpush1.bf16.msra.mxu0 %v1250
        %1616 = vmatprep.subr.bf16.mxu0 %v1257
        %1617 = vmatpush1.bf16.msra.mxu0 %v1256
        %1618 = vmatprep.subr.bf16.mxu0 %v1263
        %1619 = vmatpush1.bf16.msra.mxu0 %v1262
        %1620 = vmatprep.subr.bf16.mxu0 %v1269
        %1621 = vmatpush1.bf16.msra.mxu0 %v1268
        %1622 = vmatprep.subr.bf16.mxu0 %v1275
        %1623 = vmatpush1.bf16.msra.mxu0 %v1274
        %1624 = vmatprep.subr.bf16.mxu0 %v1281
        %1625 = vmatpush1.bf16.msra.mxu0 %v1280
        %1626 = vmatprep.subr.bf16.mxu0 %v1287
        %1627 = vmatpush1.bf16.msra.mxu0 %v1286
        %1628 = vmatprep.subr.bf16.mxu0 %v1293
        %1629 = vmatpush1.bf16.msra.mxu0 %v1292
        %1630 = vmatprep.subr.bf16.mxu0 %v1299
        %1631 = vmatpush1.bf16.msra.mxu0 %v1298
        %1632 = vmatprep.subr.bf16.mxu0 %v1305
        %1633 = vmatpush1.bf16.msra.mxu0 %v1304
        %1634 = vmatprep.subr.bf16.mxu0 %v1311
        %1635 = vmatpush1.bf16.msra.mxu0 %v1310
        %1636 = vmatprep.mubr.bf16.mxu0 %v417
        %1637 = vmatmul.mubr.bf16.gmra.mrb[0].mxu0 %v416
        %v1638 = vpop.f32.mrb[0].mxu0
        %v1639 = vadd.f32 %v617, %v1638
        %v1640 = vpop.f32.mrb[0].mxu0
        %v1641 = vadd.f32 %v621, %v1640
        %v1642 = vpop.f32.mrb[0].mxu0
        %v1643 = vadd.f32 %v617, %v1642
        %v1644 = vpop.f32.mrb[0].mxu0
        %v1645 = vadd.f32 %v621, %v1644
        %1646 = vdwg.mxu0
        %1647 = vmatprep.subr.bf16.mxu0 %v1317
        %1648 = vmatpush1.bf16.msra.mxu0 %v1316
        %1649 = vmatprep.subr.bf16.mxu0 %v1323
        %1650 = vmatpush1.bf16.msra.mxu0 %v1322
        %1651 = vmatprep.subr.bf16.mxu0 %v1329
        %1652 = vmatpush1.bf16.msra.mxu0 %v1328
        %1653 = vmatprep.subr.bf16.mxu0 %v1335
        %1654 = vmatpush1.bf16.msra.mxu0 %v1334
        %1655 = vmatprep.subr.bf16.mxu0 %v1341
        %1656 = vmatpush1.bf16.msra.mxu0 %v1340
        %1657 = vmatprep.subr.bf16.mxu0 %v1347
        %1658 = vmatpush1.bf16.msra.mxu0 %v1346
        %1659 = vmatprep.subr.bf16.mxu0 %v1353
        %1660 = vmatpush1.bf16.msra.mxu0 %v1352
        %1661 = vmatprep.subr.bf16.mxu0 %v1359
        %1662 = vmatpush1.bf16.msra.mxu0 %v1358
        %1663 = vmatprep.subr.bf16.mxu0 %v1365
        %1664 = vmatpush1.bf16.msra.mxu0 %v1364
        %1665 = vmatprep.subr.bf16.mxu0 %v1371
        %1666 = vmatpush1.bf16.msra.mxu0 %v1370
        %1667 = vmatprep.subr.bf16.mxu0 %v1377
        %1668 = vmatpush1.bf16.msra.mxu0 %v1376
        %1669 = vmatprep.subr.bf16.mxu0 %v1383
        %1670 = vmatpush1.bf16.msra.mxu0 %v1382
        %1671 = vmatprep.subr.bf16.mxu0 %v1389
        %1672 = vmatpush1.bf16.msra.mxu0 %v1388
        %1673 = vmatprep.subr.bf16.mxu0 %v1395
        %1674 = vmatpush1.bf16.msra.mxu0 %v1394
        %1675 = vmatprep.subr.bf16.mxu0 %v1401
        %1676 = vmatpush1.bf16.msra.mxu0 %v1400
        %1677 = vmatprep.subr.bf16.mxu0 %v1407
        %1678 = vmatpush1.bf16.msra.mxu0 %v1406
        %1679 = vmatprep.mubr.bf16.mxu0 %v419
        %1680 = vmatmul.mubr.bf16.gmra.mrb[0].mxu0 %v418
        %v1681 = vpop.f32.mrb[0].mxu0
        %v1682 = vadd.f32 %v1639, %v1681
        %v1683 = vpop.f32.mrb[0].mxu0
        %v1684 = vadd.f32 %v1641, %v1683
        %v1685 = vpop.f32.mrb[0].mxu0
        %v1686 = vadd.f32 %v1643, %v1685
        %v1687 = vpop.f32.mrb[0].mxu0
        %v1688 = vadd.f32 %v1645, %v1687
        %1689 = vdwg.mxu0
        %1690 = vmatprep.subr.bf16.mxu0 %v1223
        %1691 = vmatpush1.bf16.msra.mxu0 %v1222
        %1692 = vmatprep.subr.bf16.mxu0 %v1229
        %1693 = vmatpush1.bf16.msra.mxu0 %v1228
        %1694 = vmatprep.subr.bf16.mxu0 %v1235
        %1695 = vmatpush1.bf16.msra.mxu0 %v1234
        %1696 = vmatprep.subr.bf16.mxu0 %v1241
        %1697 = vmatpush1.bf16.msra.mxu0 %v1240
        %1698 = vmatprep.subr.bf16.mxu0 %v1247
        %1699 = vmatpush1.bf16.msra.mxu0 %v1246
        %1700 = vmatprep.subr.bf16.mxu0 %v1253
        %1701 = vmatpush1.bf16.msra.mxu0 %v1252
        %1702 = vmatprep.subr.bf16.mxu0 %v1259
        %1703 = vmatpush1.bf16.msra.mxu0 %v1258
        %1704 = vmatprep.subr.bf16.mxu0 %v1265
        %1705 = vmatpush1.bf16.msra.mxu0 %v1264
        %1706 = vmatprep.subr.bf16.mxu0 %v1271
        %1707 = vmatpush1.bf16.msra.mxu0 %v1270
        %1708 = vmatprep.subr.bf16.mxu0 %v1277
        %1709 = vmatpush1.bf16.msra.mxu0 %v1276
        %1710 = vmatprep.subr.bf16.mxu0 %v1283
        %1711 = vmatpush1.bf16.msra.mxu0 %v1282
        %1712 = vmatprep.subr.bf16.mxu0 %v1289
        %1713 = vmatpush1.bf16.msra.mxu0 %v1288
        %1714 = vmatprep.subr.bf16.mxu0 %v1295
        %1715 = vmatpush1.bf16.msra.mxu0 %v1294
        %1716 = vmatprep.subr.bf16.mxu0 %v1301
        %1717 = vmatpush1.bf16.msra.mxu0 %v1300
        %1718 = vmatprep.subr.bf16.mxu0 %v1307
        %1719 = vmatpush1.bf16.msra.mxu0 %v1306
        %1720 = vmatprep.subr.bf16.mxu0 %v1313
        %1721 = vmatpush1.bf16.msra.mxu0 %v1312
        %1722 = vmatprep.mubr.bf16.mxu0 %v417
        %1723 = vmatmul.mubr.bf16.gmra.mrb[0].mxu0 %v416
        %v1724 = vpop.f32.mrb[0].mxu0
        %v1725 = vadd.f32 %v625, %v1724
        %v1726 = vpop.f32.mrb[0].mxu0
        %v1727 = vadd.f32 %v629, %v1726
        %v1728 = vpop.f32.mrb[0].mxu0
        %v1729 = vadd.f32 %v625, %v1728
        %v1730 = vpop.f32.mrb[0].mxu0
        %v1731 = vadd.f32 %v629, %v1730
        %1732 = vdwg.mxu0
        %1733 = vmatprep.subr.bf16.mxu0 %v1319
        %1734 = vmatpush1.bf16.msra.mxu0 %v1318
        %1735 = vmatprep.subr.bf16.mxu0 %v1325
        %1736 = vmatpush1.bf16.msra.mxu0 %v1324
        %1737 = vmatprep.subr.bf16.mxu0 %v1331
        %1738 = vmatpush1.bf16.msra.mxu0 %v1330
        %1739 = vmatprep.subr.bf16.mxu0 %v1337
        %1740 = vmatpush1.bf16.msra.mxu0 %v1336
        %1741 = vmatprep.subr.bf16.mxu0 %v1343
        %1742 = vmatpush1.bf16.msra.mxu0 %v1342
        %1743 = vmatprep.subr.bf16.mxu0 %v1349
        %1744 = vmatpush1.bf16.msra.mxu0 %v1348
        %1745 = vmatprep.subr.bf16.mxu0 %v1355
        %1746 = vmatpush1.bf16.msra.mxu0 %v1354
        %1747 = vmatprep.subr.bf16.mxu0 %v1361
        %1748 = vmatpush1.bf16.msra.mxu0 %v1360
        %1749 = vmatprep.subr.bf16.mxu0 %v1367
        %1750 = vmatpush1.bf16.msra.mxu0 %v1366
        %1751 = vmatprep.subr.bf16.mxu0 %v1373
        %1752 = vmatpush1.bf16.msra.mxu0 %v1372
        %1753 = vmatprep.subr.bf16.mxu0 %v1379
        %1754 = vmatpush1.bf16.msra.mxu0 %v1378
        %1755 = vmatprep.subr.bf16.mxu0 %v1385
        %1756 = vmatpush1.bf16.msra.mxu0 %v1384
        %1757 = vmatprep.subr.bf16.mxu0 %v1391
        %1758 = vmatpush1.bf16.msra.mxu0 %v1390
        %1759 = vmatprep.subr.bf16.mxu0 %v1397
        %1760 = vmatpush1.bf16.msra.mxu0 %v1396
        %1761 = vmatprep.subr.bf16.mxu0 %v1403
        %1762 = vmatpush1.bf16.msra.mxu0 %v1402
        %1763 = vmatprep.subr.bf16.mxu0 %v1409
        %1764 = vmatpush1.bf16.msra.mxu0 %v1408
        %1765 = vmatprep.mubr.bf16.mxu0 %v419
        %1766 = vmatmul.mubr.bf16.gmra.mrb[0].mxu0 %v418
        %v1767 = vpop.f32.mrb[0].mxu0
        %v1768 = vadd.f32 %v1725, %v1767
        %v1769 = vpop.f32.mrb[0].mxu0
        %v1770 = vadd.f32 %v1727, %v1769
        %v1771 = vpop.f32.mrb[0].mxu0
        %v1772 = vadd.f32 %v1729, %v1771
        %v1773 = vpop.f32.mrb[0].mxu0
        %v1774 = vadd.f32 %v1731, %v1773
        %1775 = vdwg.mxu0
        %1776 = vmatprep.subr.bf16.mxu0 %v1225
        %1777 = vmatpush1.bf16.msra.mxu0 %v1224
        %1778 = vmatprep.subr.bf16.mxu0 %v1231
        %1779 = vmatpush1.bf16.msra.mxu0 %v1230
        %1780 = vmatprep.subr.bf16.mxu0 %v1237
        %1781 = vmatpush1.bf16.msra.mxu0 %v1236
        %1782 = vmatprep.subr.bf16.mxu0 %v1243
        %1783 = vmatpush1.bf16.msra.mxu0 %v1242
        %1784 = vmatprep.subr.bf16.mxu0 %v1249
        %1785 = vmatpush1.bf16.msra.mxu0 %v1248
        %1786 = vmatprep.subr.bf16.mxu0 %v1255
        %1787 = vmatpush1.bf16.msra.mxu0 %v1254
        %1788 = vmatprep.subr.bf16.mxu0 %v1261
        %1789 = vmatpush1.bf16.msra.mxu0 %v1260
        %1790 = vmatprep.subr.bf16.mxu0 %v1267
        %1791 = vmatpush1.bf16.msra.mxu0 %v1266
        %1792 = vmatprep.subr.bf16.mxu0 %v1273
        %1793 = vmatpush1.bf16.msra.mxu0 %v1272
        %1794 = vmatprep.subr.bf16.mxu0 %v1279
        %1795 = vmatpush1.bf16.msra.mxu0 %v1278
        %1796 = vmatprep.subr.bf16.mxu0 %v1285
        %1797 = vmatpush1.bf16.msra.mxu0 %v1284
        %1798 = vmatprep.subr.bf16.mxu0 %v1291
        %1799 = vmatpush1.bf16.msra.mxu0 %v1290
        %1800 = vmatprep.subr.bf16.mxu0 %v1297
        %1801 = vmatpush1.bf16.msra.mxu0 %v1296
        %1802 = vmatprep.subr.bf16.mxu0 %v1303
        %1803 = vmatpush1.bf16.msra.mxu0 %v1302
        %1804 = vmatprep.subr.bf16.mxu0 %v1309
        %1805 = vmatpush1.bf16.msra.mxu0 %v1308
        %1806 = vmatprep.subr.bf16.mxu0 %v1315
        %1807 = vmatpush1.bf16.msra.mxu0 %v1314
        %1808 = vmatprep.mubr.bf16.mxu0 %v417
        %1809 = vmatmul.mubr.bf16.gmra.mrb[0].mxu0 %v416
        %v1810 = vpop.f32.mrb[0].mxu0
        %v1811 = vadd.f32 %v633, %v1810
        %v1812 = vpop.f32.mrb[0].mxu0
        %v1813 = vadd.f32 %v637, %v1812
        %v1814 = vpop.f32.mrb[0].mxu0
        %v1815 = vadd.f32 %v633, %v1814
        %v1816 = vpop.f32.mrb[0].mxu0
        %v1817 = vadd.f32 %v637, %v1816
        %1818 = vdwg.mxu0
        %1819 = vmatprep.subr.bf16.mxu0 %v1321
        %1820 = vmatpush1.bf16.msra.mxu0 %v1320
        %1821 = vmatprep.subr.bf16.mxu0 %v1327
        %1822 = vmatpush1.bf16.msra.mxu0 %v1326
        %1823 = vmatprep.subr.bf16.mxu0 %v1333
        %1824 = vmatpush1.bf16.msra.mxu0 %v1332
        %1825 = vmatprep.subr.bf16.mxu0 %v1339
        %1826 = vmatpush1.bf16.msra.mxu0 %v1338
        %1827 = vmatprep.subr.bf16.mxu0 %v1345
        %1828 = vmatpush1.bf16.msra.mxu0 %v1344
        %1829 = vmatprep.subr.bf16.mxu0 %v1351
        %1830 = vmatpush1.bf16.msra.mxu0 %v1350
        %1831 = vmatprep.subr.bf16.mxu0 %v1357
        %1832 = vmatpush1.bf16.msra.mxu0 %v1356
        %1833 = vmatprep.subr.bf16.mxu0 %v1363
        %1834 = vmatpush1.bf16.msra.mxu0 %v1362
        %1835 = vmatprep.subr.bf16.mxu0 %v1369
        %1836 = vmatpush1.bf16.msra.mxu0 %v1368
        %1837 = vmatprep.subr.bf16.mxu0 %v1375
        %1838 = vmatpush1.bf16.msra.mxu0 %v1374
        %1839 = vmatprep.subr.bf16.mxu0 %v1381
        %1840 = vmatpush1.bf16.msra.mxu0 %v1380
        %1841 = vmatprep.subr.bf16.mxu0 %v1387
        %1842 = vmatpush1.bf16.msra.mxu0 %v1386
        %1843 = vmatprep.subr.bf16.mxu0 %v1393
        %1844 = vmatpush1.bf16.msra.mxu0 %v1392
        %1845 = vmatprep.subr.bf16.mxu0 %v1399
        %1846 = vmatpush1.bf16.msra.mxu0 %v1398
        %1847 = vmatprep.subr.bf16.mxu0 %v1405
        %1848 = vmatpush1.bf16.msra.mxu0 %v1404
        %1849 = vmatprep.subr.bf16.mxu0 %v1411
        %1850 = vmatpush1.bf16.msra.mxu0 %v1410
        %1851 = vmatprep.mubr.bf16.mxu0 %v419
        %1852 = vmatmul.mubr.bf16.gmra.mrb[0].mxu0 %v418
        %v1853 = vpop.f32.mrb[0].mxu0
        %v1854 = vadd.f32 %v1811, %v1853
        %v1855 = vpop.f32.mrb[0].mxu0
        %v1856 = vadd.f32 %v1813, %v1855
        %v1857 = vpop.f32.mrb[0].mxu0
        %v1858 = vadd.f32 %v1815, %v1857
        %v1859 = vpop.f32.mrb[0].mxu0
        %v1860 = vadd.f32 %v1817, %v1859
        %1861 = vdwg.mxu0
        %v1862 = vmax.f32 %v1682, 0.0
        %v1863 = vmax.f32 %v1684, 0.0
        %v1864 = vmax.f32 %v1768, 0.0
        %v1865 = vmax.f32 %v1770, 0.0
        %v1866 = vmax.f32 %v1854, 0.0
        %v1867 = vmax.f32 %v1856, 0.0
        %v1868 = vmax.f32 %v1686, 0.0
        %v1869 = vmax.f32 %v1688, 0.0
        %v1870 = vmax.f32 %v1772, 0.0
        %v1871 = vmax.f32 %v1774, 0.0
        %v1872 = vmax.f32 %v1858, 0.0
        %v1873 = vmax.f32 %v1860, 0.0
        %v1874 = vadd.s32 %v402, 8
        %vm1875 = vcmp.lt.s32.totalorder %v402, 0
        %v1876 = vsub.s32 0, %v402
        %v1877 = vsel %vm1875, %v1876, %v402
        %v1878 = vshrl.u32 %v1877, 4
        %v1879 = vand.u32 %v1877, 15
        %v1880 = vsub.s32 0, %v1879
        %v1881 = vsel %vm1875, %v1880, %v1879
        %vm1882 = vcmp.lt.s32.totalorder %v1874, 0
        %v1883 = vsub.s32 0, %v1874
        %v1884 = vsel %vm1882, %v1883, %v1874
        %v1885 = vshrl.u32 %v1884, 4
        %v1886 = vand.u32 %v1884, 15
        %v1887 = vsub.s32 0, %v1886
        %v1888 = vsel %vm1882, %v1887, %v1886
        %vm1889 = vcmp.ne.s32.totalorder %v1881, 0
        %vm1890 = vcmp.ne.s32.totalorder %v1888, 0
        %vm1891 = vcmp.lt.s32.totalorder %v1881, 0
        %vm1892 = vcmp.lt.s32.totalorder %v1888, 0
        %vm1893 = vmand %vm1891, %vm1889
        %vm1894 = vmand %vm1892, %vm1890
        %v1895 = vadd.s32 %v1881, 16
        %v1896 = vadd.s32 %v1888, 16
        %v1897 = vsel %vm1893, %v1895, %v1881
        %v1898 = vsel %vm1894, %v1896, %v1888
        %vm1899 = vcmp.lt.s32.totalorder %v1897, 12
        %vm1900 = vcmp.lt.s32.totalorder %v1898, 12
        %vm1901 = vcmp.lt.s32.totalorder %v1897, 0
        %v1902 = vsub.s32 0, %v1897
        %v1903 = vsel %vm1901, %v1902, %v1897
        %v1904 = vshrl.u32 %v1903, 2
        %v1905 = vand.u32 %v1903, 3
        %v1906 = vsub.s32 0, %v1905
        %v1907 = vsel %vm1901, %v1906, %v1905
        %vm1908 = vcmp.lt.s32.totalorder %v1898, 0
        %v1909 = vsub.s32 0, %v1898
        %v1910 = vsel %vm1908, %v1909, %v1898
        %v1911 = vshrl.u32 %v1910, 2
        %v1912 = vand.u32 %v1910, 3
        %v1913 = vsub.s32 0, %v1912
        %v1914 = vsel %vm1908, %v1913, %v1912
        %vm1915 = vcmp.ne.s32.totalorder %v1907, 0
        %vm1916 = vcmp.ne.s32.totalorder %v1914, 0
        %vm1917 = vcmp.lt.s32.totalorder %v1907, 0
        %vm1918 = vcmp.lt.s32.totalorder %v1914, 0
        %vm1919 = vmand %vm1917, %vm1915
        %vm1920 = vmand %vm1918, %vm1916
        %v1921 = vadd.s32 %v1907, 4
        %v1922 = vadd.s32 %v1914, 4
        %v1923 = vsel %vm1919, %v1921, %v1907
        %v1924 = vsel %vm1920, %v1922, %v1914
        %vm1925 = vcmp.ne.s32.totalorder %v1923, 3
        %vm1926 = vcmp.ne.s32.totalorder %v1924, 3
        %vm1927 = vmand %vm1899, %vm1925
        %vm1928 = vmand %vm1900, %vm1926
        %v1929 = vsel %vm1927, 1, 0
        %v1930 = vsel %vm1928, 1, 0
        %vm1931 = vcmp.eq.s32.totalorder %v1929, 1
        %vm1932 = vcmp.eq.s32.totalorder %v1930, 1
        %v1933 = vsel %vm1931, %v1862, 0.0
        %v1934 = vsel %vm1931, %v1863, 0.0
        %v1935 = vsel %vm1931, %v1864, 0.0
        %v1936 = vsel %vm1931, %v1865, 0.0
        %v1937 = vsel %vm1931, %v1866, 0.0
        %v1938 = vsel %vm1931, %v1867, 0.0
        %v1939 = vsel %vm1932, %v1868, 0.0
        %v1940 = vsel %vm1932, %v1869, 0.0
        %v1941 = vsel %vm1932, %v1870, 0.0
        %v1942 = vsel %vm1932, %v1871, 0.0
        %v1943 = vsel %vm1932, %v1872, 0.0
        %v1944 = vsel %vm1932, %v1873, 0.0
        %v1945 = vadd.f32 %v1933, %v1939
        %v1946 = vrot.slane %v1945, 4
        %v1947 = vadd.f32 %v1945, %v1946
        %v1948 = vrot.slane %v1947, 2
        %v1949 = vadd.f32 %v1947, %v1948
        %v1950 = vrot.slane %v1949, 1
        %v1951 = vadd.f32 %v1949, %v1950
        %v1952 = vadd.f32 %v1934, %v1940
        %v1953 = vrot.slane %v1952, 4
        %v1954 = vadd.f32 %v1952, %v1953
        %v1955 = vrot.slane %v1954, 2
        %v1956 = vadd.f32 %v1954, %v1955
        %v1957 = vrot.slane %v1956, 1
        %v1958 = vadd.f32 %v1956, %v1957
        %v1959 = vadd.f32 %v1935, %v1941
        %v1960 = vrot.slane %v1959, 4
        %v1961 = vadd.f32 %v1959, %v1960
        %v1962 = vrot.slane %v1961, 2
        %v1963 = vadd.f32 %v1961, %v1962
        %v1964 = vrot.slane %v1963, 1
        %v1965 = vadd.f32 %v1963, %v1964
        %v1966 = vadd.f32 %v1936, %v1942
        %v1967 = vrot.slane %v1966, 4
        %v1968 = vadd.f32 %v1966, %v1967
        %v1969 = vrot.slane %v1968, 2
        %v1970 = vadd.f32 %v1968, %v1969
        %v1971 = vrot.slane %v1970, 1
        %v1972 = vadd.f32 %v1970, %v1971
        %v1973 = vadd.f32 %v1937, %v1943
        %v1974 = vrot.slane %v1973, 4
        %v1975 = vadd.f32 %v1973, %v1974
        %v1976 = vrot.slane %v1975, 2
        %v1977 = vadd.f32 %v1975, %v1976
        %v1978 = vrot.slane %v1977, 1
        %v1979 = vadd.f32 %v1977, %v1978
        %v1980 = vadd.f32 %v1938, %v1944
        %v1981 = vrot.slane %v1980, 4
        %v1982 = vadd.f32 %v1980, %v1981
        %v1983 = vrot.slane %v1982, 2
        %v1984 = vadd.f32 %v1982, %v1983
        %v1985 = vrot.slane %v1984, 1
        %v1986 = vadd.f32 %v1984, %v1985
        %v1987 = vmul.f32 %v1951, 0.11111111
        %v1988 = vmul.f32 %v1958, 0.11111111
        %v1989 = vmul.f32 %v1965, 0.11111111
        %v1990 = vmul.f32 %v1972, 0.11111111
        %v1991 = vmul.f32 %v1979, 0.11111111
        %v1992 = vmul.f32 %v1986, 0.11111111
        %v1993 = vld [vmem:[%s5] sm:$0xff]
        %v1994 = vld [vmem:[%s5 + $0x8] sm:$0xff]
        %v1995 = vld [vmem:[%s5 + $0x10] sm:$0xff]
        %v1996 = vld [vmem:[%s5 + $0x18] sm:$0xff]
        %v1997 = vld [vmem:[%s5 + $0x20] sm:$0xff]
        %v1998 = vld [vmem:[%s5 + $0x28] sm:$0xff]
        %v1999 = vld [vmem:[%s5 + $0x30] sm:$0xff]
        %v2000 = vld [vmem:[%s5 + $0x38] sm:$0xff]
        %v2001 = vld [vmem:[%s5 + $0x40] sm:$0xff]
        %v2002 = vld [vmem:[%s5 + $0x48] sm:$0xff]
        %v2003 = vld [vmem:[%s5 + $0x50] sm:$0xff]
        %v2004 = vld [vmem:[%s5 + $0x58] sm:$0xff]
        %v2005 = vld [vmem:[%s5 + $0x60] sm:$0xff]
        %v2006 = vld [vmem:[%s5 + $0x68] sm:$0xff]
        %v2007 = vld [vmem:[%s5 + $0x70] sm:$0xff]
        %v2008 = vld [vmem:[%s5 + $0x78] sm:$0xff]
        %v2009 = vld [vmem:[%s5 + $0x80] sm:$0xff]
        %v2010 = vld [vmem:[%s5 + $0x88] sm:$0xff]
        %v2011 = vld [vmem:[%s5 + $0x90] sm:$0xff]
        %v2012 = vld [vmem:[%s5 + $0x98] sm:$0xff]
        %v2013 = vld [vmem:[%s5 + $0xa0] sm:$0xff]
        %v2014 = vld [vmem:[%s5 + $0xa8] sm:$0xff]
        %v2015 = vld [vmem:[%s5 + $0xb0] sm:$0xff]
        %v2016 = vld [vmem:[%s5 + $0xb8] sm:$0xff]
        %v2017 = vld [vmem:[%s5 + $0xc0] sm:$0xff]
        %v2018 = vld [vmem:[%s5 + $0xc8] sm:$0xff]
        %v2019 = vld [vmem:[%s5 + $0xd0] sm:$0xff]
        %v2020 = vld [vmem:[%s5 + $0xd8] sm:$0xff]
        %v2021 = vld [vmem:[%s5 + $0xe0] sm:$0xff]
        %v2022 = vld [vmem:[%s5 + $0xe8] sm:$0xff]
        %v2023 = vld [vmem:[%s5 + $0xf0] sm:$0xff]
        %v2024 = vld [vmem:[%s5 + $0xf8] sm:$0xff]
        %v2025 = vld [vmem:[%s5 + $0x100] sm:$0xff]
        %v2026 = vld [vmem:[%s5 + $0x108] sm:$0xff]
        %v2027 = vld [vmem:[%s5 + $0x110] sm:$0xff]
        %v2028 = vld [vmem:[%s5 + $0x118] sm:$0xff]
        %v2029 = vld [vmem:[%s5 + $0x120] sm:$0xff]
        %v2030 = vld [vmem:[%s5 + $0x128] sm:$0xff]
        %v2031 = vld [vmem:[%s5 + $0x130] sm:$0xff]
        %v2032 = vld [vmem:[%s5 + $0x138] sm:$0xff]
        %v2033 = vld [vmem:[%s5 + $0x140] sm:$0xff]
        %v2034 = vld [vmem:[%s5 + $0x148] sm:$0xff]
        %v2035 = vld [vmem:[%s5 + $0x150] sm:$0xff]
        %v2036 = vld [vmem:[%s5 + $0x158] sm:$0xff]
        %v2037 = vld [vmem:[%s5 + $0x160] sm:$0xff]
        %v2038 = vld [vmem:[%s5 + $0x168] sm:$0xff]
        %v2039 = vld [vmem:[%s5 + $0x170] sm:$0xff]
        %v2040 = vld [vmem:[%s5 + $0x178] sm:$0xff]
        %v2041 = vld [vmem:[%s5 + $0x180] sm:$0xff]
        %v2042 = vld [vmem:[%s5 + $0x188] sm:$0xff]
        %v2043 = vld [vmem:[%s5 + $0x190] sm:$0xff]
        %v2044 = vld [vmem:[%s5 + $0x198] sm:$0xff]
        %v2045 = vld [vmem:[%s5 + $0x1a0] sm:$0xff]
        %v2046 = vld [vmem:[%s5 + $0x1a8] sm:$0xff]
        %v2047 = vld [vmem:[%s5 + $0x1b0] sm:$0xff]
        %v2048 = vld [vmem:[%s5 + $0x1b8] sm:$0xff]
        %v2049 = vld [vmem:[%s5 + $0x1c0] sm:$0xff]
        %v2050 = vld [vmem:[%s5 + $0x1c8] sm:$0xff]
        %v2051 = vld [vmem:[%s5 + $0x1d0] sm:$0xff]
        %v2052 = vld [vmem:[%s5 + $0x1d8] sm:$0xff]
        %v2053 = vld [vmem:[%s5 + $0x1e0] sm:$0xff]
        %v2054 = vld [vmem:[%s5 + $0x1e8] sm:$0xff]
        %v2055 = vld [vmem:[%s5 + $0x1f0] sm:$0xff]
        %v2056 = vld [vmem:[%s5 + $0x1f8] sm:$0xff]
        %v2057 = vld [vmem:[%s5 + $0x200] sm:$0xff]
        %v2058 = vld [vmem:[%s5 + $0x208] sm:$0xff]
        %v2059 = vld [vmem:[%s5 + $0x210] sm:$0xff]
        %v2060 = vld [vmem:[%s5 + $0x218] sm:$0xff]
        %v2061 = vld [vmem:[%s5 + $0x220] sm:$0xff]
        %v2062 = vld [vmem:[%s5 + $0x228] sm:$0xff]
        %v2063 = vld [vmem:[%s5 + $0x230] sm:$0xff]
        %v2064 = vld [vmem:[%s5 + $0x238] sm:$0xff]
        %v2065 = vld [vmem:[%s5 + $0x240] sm:$0xff]
        %v2066 = vld [vmem:[%s5 + $0x248] sm:$0xff]
        %v2067 = vld [vmem:[%s5 + $0x250] sm:$0xff]
        %v2068 = vld [vmem:[%s5 + $0x258] sm:$0xff]
        %v2069 = vld [vmem:[%s5 + $0x260] sm:$0xff]
        %v2070 = vld [vmem:[%s5 + $0x268] sm:$0xff]
        %v2071 = vld [vmem:[%s5 + $0x270] sm:$0xff]
        %v2072 = vld [vmem:[%s5 + $0x278] sm:$0xff]
        %v2073 = vld [vmem:[%s5 + $0x280] sm:$0xff]
        %v2074 = vld [vmem:[%s5 + $0x288] sm:$0xff]
        %v2075 = vld [vmem:[%s5 + $0x290] sm:$0xff]
        %v2076 = vld [vmem:[%s5 + $0x298] sm:$0xff]
        %v2077 = vld [vmem:[%s5 + $0x2a0] sm:$0xff]
        %v2078 = vld [vmem:[%s5 + $0x2a8] sm:$0xff]
        %v2079 = vld [vmem:[%s5 + $0x2b0] sm:$0xff]
        %v2080 = vld [vmem:[%s5 + $0x2b8] sm:$0xff]
        %v2081 = vld [vmem:[%s5 + $0x2c0] sm:$0xff]
        %v2082 = vld [vmem:[%s5 + $0x2c8] sm:$0xff]
        %v2083 = vld [vmem:[%s5 + $0x2d0] sm:$0xff]
        %v2084 = vld [vmem:[%s5 + $0x2d8] sm:$0xff]
        %v2085 = vld [vmem:[%s5 + $0x2e0] sm:$0xff]
        %v2086 = vld [vmem:[%s5 + $0x2e8] sm:$0xff]
        %v2087 = vld [vmem:[%s5 + $0x2f0] sm:$0xff]
        %v2088 = vld [vmem:[%s5 + $0x2f8] sm:$0xff]
        %v2089 = vld [vmem:[%s6] sm:$0x1]
        %2090 = vmatprep.subr.mxu0 0.0
        %2091 = vmatpush1.msra.mxu0 %v1993
        %2092 = vmatprep.subr.mxu0 0.0
        %2093 = vmatpush1.msra.mxu0 %v1994
        %2094 = vmatprep.subr.mxu0 0.0
        %2095 = vmatpush1.msra.mxu0 %v1995
        %2096 = vmatprep.subr.mxu0 0.0
        %2097 = vmatpush1.msra.mxu0 %v1996
        %2098 = vmatprep.subr.mxu0 0.0
        %2099 = vmatpush1.msra.mxu0 %v1997
        %2100 = vmatprep.subr.mxu0 0.0
        %2101 = vmatpush1.msra.mxu0 %v1998
        %2102 = vmatprep.subr.mxu0 0.0
        %2103 = vmatpush1.msra.mxu0 %v1999
        %2104 = vmatprep.subr.mxu0 0.0
        %2105 = vmatpush1.msra.mxu0 %v2000
        %2106 = vmatprep.subr.mxu0 0.0
        %2107 = vmatpush1.msra.mxu0 %v2001
        %2108 = vmatprep.subr.mxu0 0.0
        %2109 = vmatpush1.msra.mxu0 %v2002
        %2110 = vmatprep.subr.mxu0 0.0
        %2111 = vmatpush1.msra.mxu0 %v2003
        %2112 = vmatprep.subr.mxu0 0.0
        %2113 = vmatpush1.msra.mxu0 %v2004
        %2114 = vmatprep.subr.mxu0 0.0
        %2115 = vmatpush1.msra.mxu0 %v2005
        %2116 = vmatprep.subr.mxu0 0.0
        %2117 = vmatpush1.msra.mxu0 %v2006
        %2118 = vmatprep.subr.mxu0 0.0
        %2119 = vmatpush1.msra.mxu0 %v2007
        %2120 = vmatprep.subr.mxu0 0.0
        %2121 = vmatpush1.msra.mxu0 %v2008
        %2122 = vmatprep.subr.mxu0 0.0
        %2123 = vmatpush1.msra.mxu0 %v2009
        %2124 = vmatprep.subr.mxu0 0.0
        %2125 = vmatpush1.msra.mxu0 %v2010
        %2126 = vmatprep.subr.mxu0 0.0
        %2127 = vmatpush1.msra.mxu0 %v2011
        %2128 = vmatprep.subr.mxu0 0.0
        %2129 = vmatpush1.msra.mxu0 %v2012
        %2130 = vmatprep.subr.mxu0 0.0
        %2131 = vmatpush1.msra.mxu0 %v2013
        %2132 = vmatprep.subr.mxu0 0.0
        %2133 = vmatpush1.msra.mxu0 %v2014
        %2134 = vmatprep.subr.mxu0 0.0
        %2135 = vmatpush1.msra.mxu0 %v2015
        %2136 = vmatprep.subr.mxu0 0.0
        %2137 = vmatpush1.msra.mxu0 %v2016
        %2138 = vmatprep.subr.mxu0 0.0
        %2139 = vmatpush1.msra.mxu0 %v2017
        %2140 = vmatprep.subr.mxu0 0.0
        %2141 = vmatpush1.msra.mxu0 %v2018
        %2142 = vmatprep.subr.mxu0 0.0
        %2143 = vmatpush1.msra.mxu0 %v2019
        %2144 = vmatprep.subr.mxu0 0.0
        %2145 = vmatpush1.msra.mxu0 %v2020
        %2146 = vmatprep.subr.mxu0 0.0
        %2147 = vmatpush1.msra.mxu0 %v2021
        %2148 = vmatprep.subr.mxu0 0.0
        %2149 = vmatpush1.msra.mxu0 %v2022
        %2150 = vmatprep.subr.mxu0 0.0
        %2151 = vmatpush1.msra.mxu0 %v2023
        %2152 = vmatprep.subr.mxu0 0.0
        %2153 = vmatpush1.msra.mxu0 %v2024
        %2154 = vmatprep.mubr.f32.mxu0 %v1988
        %2155 = vmatmul.mubr.f32.gmra.mrb[0].mxu0 %v1987
        %v2156 = vpop.f32.mrb[0].mxu0
        %v2157 = vadd.f32 %v2089, %v2156
        %v2158 = vpop.f32.mrb[0].mxu0
        %2159 = vdwg.mxu0
        %2160 = vmatprep.subr.mxu0 0.0
        %2161 = vmatpush1.msra.mxu0 %v2025
        %2162 = vmatprep.subr.mxu0 0.0
        %2163 = vmatpush1.msra.mxu0 %v2026
        %2164 = vmatprep.subr.mxu0 0.0
        %2165 = vmatpush1.msra.mxu0 %v2027
        %2166 = vmatprep.subr.mxu0 0.0
        %2167 = vmatpush1.msra.mxu0 %v2028
        %2168 = vmatprep.subr.mxu0 0.0
        %2169 = vmatpush1.msra.mxu0 %v2029
        %2170 = vmatprep.subr.mxu0 0.0
        %2171 = vmatpush1.msra.mxu0 %v2030
        %2172 = vmatprep.subr.mxu0 0.0
        %2173 = vmatpush1.msra.mxu0 %v2031
        %2174 = vmatprep.subr.mxu0 0.0
        %2175 = vmatpush1.msra.mxu0 %v2032
        %2176 = vmatprep.subr.mxu0 0.0
        %2177 = vmatpush1.msra.mxu0 %v2033
        %2178 = vmatprep.subr.mxu0 0.0
        %2179 = vmatpush1.msra.mxu0 %v2034
        %2180 = vmatprep.subr.mxu0 0.0
        %2181 = vmatpush1.msra.mxu0 %v2035
        %2182 = vmatprep.subr.mxu0 0.0
        %2183 = vmatpush1.msra.mxu0 %v2036
        %2184 = vmatprep.subr.mxu0 0.0
        %2185 = vmatpush1.msra.mxu0 %v2037
        %2186 = vmatprep.subr.mxu0 0.0
        %2187 = vmatpush1.msra.mxu0 %v2038
        %2188 = vmatprep.subr.mxu0 0.0
        %2189 = vmatpush1.msra.mxu0 %v2039
        %2190 = vmatprep.subr.mxu0 0.0
        %2191 = vmatpush1.msra.mxu0 %v2040
        %2192 = vmatprep.subr.mxu0 0.0
        %2193 = vmatpush1.msra.mxu0 %v2041
        %2194 = vmatprep.subr.mxu0 0.0
        %2195 = vmatpush1.msra.mxu0 %v2042
        %2196 = vmatprep.subr.mxu0 0.0
        %2197 = vmatpush1.msra.mxu0 %v2043
        %2198 = vmatprep.subr.mxu0 0.0
        %2199 = vmatpush1.msra.mxu0 %v2044
        %2200 = vmatprep.subr.mxu0 0.0
        %2201 = vmatpush1.msra.mxu0 %v2045
        %2202 = vmatprep.subr.mxu0 0.0
        %2203 = vmatpush1.msra.mxu0 %v2046
        %2204 = vmatprep.subr.mxu0 0.0
        %2205 = vmatpush1.msra.mxu0 %v2047
        %2206 = vmatprep.subr.mxu0 0.0
        %2207 = vmatpush1.msra.mxu0 %v2048
        %2208 = vmatprep.subr.mxu0 0.0
        %2209 = vmatpush1.msra.mxu0 %v2049
        %2210 = vmatprep.subr.mxu0 0.0
        %2211 = vmatpush1.msra.mxu0 %v2050
        %2212 = vmatprep.subr.mxu0 0.0
        %2213 = vmatpush1.msra.mxu0 %v2051
        %2214 = vmatprep.subr.mxu0 0.0
        %2215 = vmatpush1.msra.mxu0 %v2052
        %2216 = vmatprep.subr.mxu0 0.0
        %2217 = vmatpush1.msra.mxu0 %v2053
        %2218 = vmatprep.subr.mxu0 0.0
        %2219 = vmatpush1.msra.mxu0 %v2054
        %2220 = vmatprep.subr.mxu0 0.0
        %2221 = vmatpush1.msra.mxu0 %v2055
        %2222 = vmatprep.subr.mxu0 0.0
        %2223 = vmatpush1.msra.mxu0 %v2056
        %2224 = vmatprep.mubr.f32.mxu0 %v1990
        %2225 = vmatmul.mubr.f32.gmra.mrb[0].mxu0 %v1989
        %v2226 = vpop.f32.mrb[0].mxu0
        %v2227 = vadd.f32 %v2157, %v2226
        %v2228 = vpop.f32.mrb[0].mxu0
        %2229 = vdwg.mxu0
        %2230 = vmatprep.subr.mxu0 0.0
        %2231 = vmatpush1.msra.mxu0 %v2057
        %2232 = vmatprep.subr.mxu0 0.0
        %2233 = vmatpush1.msra.mxu0 %v2058
        %2234 = vmatprep.subr.mxu0 0.0
        %2235 = vmatpush1.msra.mxu0 %v2059
        %2236 = vmatprep.subr.mxu0 0.0
        %2237 = vmatpush1.msra.mxu0 %v2060
        %2238 = vmatprep.subr.mxu0 0.0
        %2239 = vmatpush1.msra.mxu0 %v2061
        %2240 = vmatprep.subr.mxu0 0.0
        %2241 = vmatpush1.msra.mxu0 %v2062
        %2242 = vmatprep.subr.mxu0 0.0
        %2243 = vmatpush1.msra.mxu0 %v2063
        %2244 = vmatprep.subr.mxu0 0.0
        %2245 = vmatpush1.msra.mxu0 %v2064
        %2246 = vmatprep.subr.mxu0 0.0
        %2247 = vmatpush1.msra.mxu0 %v2065
        %2248 = vmatprep.subr.mxu0 0.0
        %2249 = vmatpush1.msra.mxu0 %v2066
        %2250 = vmatprep.subr.mxu0 0.0
        %2251 = vmatpush1.msra.mxu0 %v2067
        %2252 = vmatprep.subr.mxu0 0.0
        %2253 = vmatpush1.msra.mxu0 %v2068
        %2254 = vmatprep.subr.mxu0 0.0
        %2255 = vmatpush1.msra.mxu0 %v2069
        %2256 = vmatprep.subr.mxu0 0.0
        %2257 = vmatpush1.msra.mxu0 %v2070
        %2258 = vmatprep.subr.mxu0 0.0
        %2259 = vmatpush1.msra.mxu0 %v2071
        %2260 = vmatprep.subr.mxu0 0.0
        %2261 = vmatpush1.msra.mxu0 %v2072
        %2262 = vmatprep.subr.mxu0 0.0
        %2263 = vmatpush1.msra.mxu0 %v2073
        %2264 = vmatprep.subr.mxu0 0.0
        %2265 = vmatpush1.msra.mxu0 %v2074
        %2266 = vmatprep.subr.mxu0 0.0
        %2267 = vmatpush1.msra.mxu0 %v2075
        %2268 = vmatprep.subr.mxu0 0.0
        %2269 = vmatpush1.msra.mxu0 %v2076
        %2270 = vmatprep.subr.mxu0 0.0
        %2271 = vmatpush1.msra.mxu0 %v2077
        %2272 = vmatprep.subr.mxu0 0.0
        %2273 = vmatpush1.msra.mxu0 %v2078
        %2274 = vmatprep.subr.mxu0 0.0
        %2275 = vmatpush1.msra.mxu0 %v2079
        %2276 = vmatprep.subr.mxu0 0.0
        %2277 = vmatpush1.msra.mxu0 %v2080
        %2278 = vmatprep.subr.mxu0 0.0
        %2279 = vmatpush1.msra.mxu0 %v2081
        %2280 = vmatprep.subr.mxu0 0.0
        %2281 = vmatpush1.msra.mxu0 %v2082
        %2282 = vmatprep.subr.mxu0 0.0
        %2283 = vmatpush1.msra.mxu0 %v2083
        %2284 = vmatprep.subr.mxu0 0.0
        %2285 = vmatpush1.msra.mxu0 %v2084
        %2286 = vmatprep.subr.mxu0 0.0
        %2287 = vmatpush1.msra.mxu0 %v2085
        %2288 = vmatprep.subr.mxu0 0.0
        %2289 = vmatpush1.msra.mxu0 %v2086
        %2290 = vmatprep.subr.mxu0 0.0
        %2291 = vmatpush1.msra.mxu0 %v2087
        %2292 = vmatprep.subr.mxu0 0.0
        %2293 = vmatpush1.msra.mxu0 %v2088
        %2294 = vmatprep.mubr.f32.mxu0 %v1992
        %2295 = vmatmul.mubr.f32.gmra.mrb[0].mxu0 %v1991
        %v2296 = vpop.f32.mrb[0].mxu0
        %v2297 = vadd.f32 %v2227, %v2296
        %v2298 = vpop.f32.mrb[0].mxu0
        %2299 = vdwg.mxu0
        %2300 = vst [vmem:[%s270] sm:$0x1] %v2297
        %s2301 = sand.u32 %s181, 1
        %s2302 = scalar_lea.sflag [#allocation3], %s2301
        %s2303 = sand.u32 %s181, 1
        %s2304 = scalar_lea.vmem [#allocation2], %s2303
        // Predicated region
        $region49: #{auxiliary_head_forward.1} parent=47 // pred_check
          %p2305 = pneg %p191
        $region50: #{auxiliary_head_forward.1} parent=47 // pred_check_branch
          %2307 = sbr.rel (%p2305) target = $region52
        $region51: #{auxiliary_head_forward.1} parent=47 // pred_region
          %s2309 = ssub.s32 16, 16
          %2310 = vsyncadd %s2302, %s2309
          %s2311 = smul.addr %s21, 16
          %s2312 = scalar_lea.hbm %s7, %s2311
          %s2314 = sshll.u32 %s2304, 4
          %s2315 = int_to_ptr.vmem [resolvable:$true] %s2314
          %2317 = dma.vmem_to_hbm [thread:$0]  %s2315, 16, %s2312, %s2302
        $region52: #{auxiliary_head_forward.1} parent=47 // pred_fallthru
          _
      $region48: #{auxiliary_head_forward.1} parent=5 // pred_fallthru
        _
      %p2318 = scmp.le.s32.totalorder 2, %s16
      // Predicated region
      $region53: #{auxiliary_head_forward.1} parent=5 // pred_check
        %p2319 = pneg %p2318
      $region54: #{auxiliary_head_forward.1} parent=5 // pred_check_branch
        %2321 = sbr.rel (%p2319) target = $region56
      $region55: #{auxiliary_head_forward.1} parent=5 // pred_region
        %s2322 = ssub.s32 %s16, 2
        // Predicated region
        $region57: #{auxiliary_head_forward.1} parent=55 // pred_check
          %p2323 = pneg %p197
        $region58: #{auxiliary_head_forward.1} parent=55 // pred_check_branch
          %2325 = sbr.rel (%p2323) target = $region60
        $region59: #{auxiliary_head_forward.1} parent=55 // pred_region
          %s2326 = sand.u32 %s182, 1
          %s2327 = scalar_lea.sflag [#allocation3], %s2326
          %s2328 = sand.u32 %s182, 1
          %s2329 = scalar_lea.vmem [#allocation2], %s2328
          %2330 = dma.done %s2327, 16
        $region60: #{auxiliary_head_forward.1} parent=55 // pred_fallthru
          _
      $region56: #{auxiliary_head_forward.1} parent=5 // pred_fallthru
        _
    $region6: #{auxiliary_head_forward.1} parent=1 // loop_footer
      %s20 = sadd.s32 1, %s16
    $region7: #{auxiliary_head_forward.1} parent=1 // loop_footer_branch
      %15 = sbr.rel target = $region3
    $region8: #{auxiliary_head_forward.1} parent=1 // loop_exit
      _
    %2331 = vsyncpa [#allocation3], 1
    %s2332 = scalar_lea.sflag [#allocation3], 1
    %2333 = vsyncpa %s2332, 1

</llo_original>
